<compile_context>
chip_gen: v7x
topology: tpu7x:2x2x1
jax: 0.10.0
libtpu: 0.0.40
codegen_flags: <defaults>
</compile_context>

<pallas_src>
import functools

import jax
import jax.numpy as jnp
from jax.experimental import pallas as pl
from jax.experimental.pallas import tpu as pltpu


def _round_up(n, m):
    return ((n + m - 1) // m) * m


def _bias_leaky_relu(acc_f32, b_f32, negative_slope=0.01):
    """Bias add + LeakyReLU epilogue in f32: mul+max (2 VALU ops)."""
    y = acc_f32 + b_f32
    return jnp.maximum(y, negative_slope * y)


def bc_mlp_kernel(x_ref,
                  w1_ref, b1_ref,
                  w2_ref, b2_ref,
                  w3_ref, b3_ref,
                  w4_ref, b4_ref,
                  w5_ref, b5_ref,
                  o_ref, *, split):
    """Fused 5-layer MLP on one batch tile; weights/biases are VMEM-resident.

    bf16 MXU operands, f32 accumulation + epilogue. When `split` is True the
    tile is processed as two half-tiles so MXU and VPU work can overlap.
    """
    w_refs = (w1_ref, w2_ref, w3_ref, w4_ref, w5_ref)
    b_refs = (b1_ref, b2_ref, b3_ref, b4_ref, b5_ref)
    n_layers = len(w_refs)

    if split:
        half = x_ref.shape[0] // 2
        h0 = x_ref[:half, :]   # bf16 [half, d0]
        h1 = x_ref[half:, :]
        for li in range(n_layers):
            w = w_refs[li][...]
            b = b_refs[li][...]
            a0 = jnp.dot(h0, w, preferred_element_type=jnp.float32)
            a1 = jnp.dot(h1, w, preferred_element_type=jnp.float32)
            h0 = _bias_leaky_relu(a0, b)
            h1 = _bias_leaky_relu(a1, b)
            if li != n_layers - 1:
                h0 = h0.astype(jnp.bfloat16)
                h1 = h1.astype(jnp.bfloat16)
        o_ref[:half, :] = h0.astype(o_ref.dtype)
        o_ref[half:, :] = h1.astype(o_ref.dtype)
    else:
        h = x_ref[...]         # bf16 [tm, d0]
        for li in range(n_layers):
            a = jnp.dot(h, w_refs[li][...], preferred_element_type=jnp.float32)
            h = _bias_leaky_relu(a, b_refs[li][...])
            if li != n_layers - 1:
                h = h.astype(jnp.bfloat16)
        o_ref[...] = h.astype(o_ref.dtype)


def prepare_bc_params(params):
    """Pad weights/biases ONCE so every feature dim is a multiple of 128.

    params: list of 5 (W[in,out], b[1,out] or [out]) f32 tuples
            (W is the transpose of the torch Linear weight).
    Returns (flat_padded_operands, dims) to be reused across forward calls.
    """
    flat = []
    dims = []
    for (w, b) in params:
        din, dout = w.shape
        dinp, doutp = _round_up(din, 128), _round_up(dout, 128)
        wp = jnp.zeros((dinp, doutp), jnp.bfloat16).at[:din, :dout].set(
            w.astype(jnp.bfloat16))
        bp = jnp.zeros((1, doutp), jnp.float32).at[:, :dout].set(
            b.astype(jnp.float32).reshape(1, dout))
        flat.extend([wp, bp])
        dims.append((din, dout, dinp, doutp))
    return tuple(flat), tuple(dims)


def bc_forward(x, prepared, *, tm_max=512, out_dtype=jnp.bfloat16):
    """Forward pass. `prepared` comes from prepare_bc_params (padded once)."""
    flat, dims = prepared
    B, L = x.shape
    assert L == dims[0][0], "input feature dim mismatch"
    actions = dims[-1][1]
    d_in = dims[0][2]
    d_out = dims[-1][3]

    # ---- batch tiling: multiples of 16 rows (bf16 sublanes), even split of B
    # across grid steps, and >=2 steps when possible (v7x megacore sharding).
    tm_target = max(16, min(tm_max, _round_up(B, 16)))
    n_steps = pl.cdiv(B, tm_target)
    if n_steps == 1 and B >= 32:
        n_steps = 2
    tm = _round_up(pl.cdiv(B, n_steps), 16)
    b_pad = n_steps * tm

    # ---- input: skip the padded copy when x is already aligned
    if L == d_in and B == b_pad:
        xp = x.astype(jnp.bfloat16)
    else:
        xp = jnp.zeros((b_pad, d_in), jnp.bfloat16).at[:B, :L].set(
            x.astype(jnp.bfloat16))

    # split into two half-tiles only when each half is still a clean 16-row tile
    split = (tm >= 32) and (tm % 32 == 0)

    # ---- explicit VMEM budget: resident weights + pipelined tiles + f32 scratch
    weight_bytes = sum(int(a.size) * a.dtype.itemsize for a in flat)
    max_w = max(max(dinp, doutp) for (_, _, dinp, doutp) in dims)
    act_bytes = 2 * tm * d_in * 2 + 2 * tm * d_out * 2   # double-buffered bf16 tiles
    inter_bytes = 4 * tm * max_w * 4                      # live f32 intermediates
    needed = weight_bytes + act_bytes + inter_bytes + (4 << 20)
    vmem_limit = int(min(max(needed, 32 << 20), 64 << 20))  # valid on v5e/v6e/v7x

    # weights/biases: whole-array, VMEM-resident across all grid steps (their
    # block index never changes, so they are not re-DMA'd per step)
    resident = pl.BlockSpec(memory_space=pltpu.VMEM)

    out = pl.pallas_call(
        functools.partial(bc_mlp_kernel, split=split),
        out_shape=jax.ShapeDtypeStruct((b_pad, d_out), out_dtype),
        grid=(n_steps,),
        in_specs=[pl.BlockSpec((tm, d_in), lambda i: (i, 0))]
                 + [resident] * len(flat),
        out_specs=pl.BlockSpec((tm, d_out), lambda i: (i, 0)),
        compiler_params=pltpu.CompilerParams(
            dimension_semantics=("parallel",),
            vmem_limit_bytes=vmem_limit),
    )(xp, *flat)

    if b_pad == B and d_out == actions:
        return out
    return out[:B, :actions]


def init_params(key, latents, hiddens, actions):
    """Deterministic synthetic parameters with the BC module's layer shapes."""
    dims = [(latents, hiddens),
            (hiddens, 2 * hiddens),
            (2 * hiddens, 2 * hiddens),
            (2 * hiddens, hiddens),
            (hiddens, actions)]
    params = []
    for (din, dout) in dims:
        key, kw, kb = jax.random.split(key, 3)
        bound = 1.0 / jnp.sqrt(din)  # same scale family as torch Linear init
        w = jax.random.uniform(kw, (din, dout), jnp.float32, -bound, bound)
        b = jax.random.uniform(kb, (1, dout), jnp.float32, -bound, bound)
        params.append((w, b))
    return params


def _leaky_relu_f32(x, negative_slope=0.01):
    return jnp.where(x > 0, x, negative_slope * x)


def bc_reference_f32(x, params):
    """Plain-JAX f32 reference (PyTorch-equivalent math, dropout in eval mode)."""
    h = x
    for (w, b) in params:
        h = _leaky_relu_f32(h @ w + b)
    return h


def bc_reference_bf16(x, params):
    """Plain-JAX reference with the kernel's bf16-operand / f32-accumulate scheme."""
    h = x.astype(jnp.float32)
    for (w, b) in params:
        acc = jnp.dot(h.astype(jnp.bfloat16), w.astype(jnp.bfloat16),
                      preferred_element_type=jnp.float32)
        h = _leaky_relu_f32(acc + b)
    return h


if __name__ == "__main__":
    latents, hiddens, actions = 32, 32, 8
    batch = 64  # with tm_max=32 -> 2 grid steps, tm=32, split half-tiles of 16

    key = jax.random.PRNGKey(0)
    key, kx = jax.random.split(key)
    x = jax.random.normal(kx, (batch, latents), jnp.float32)

    params = init_params(key, latents, hiddens, actions)
    prepared = prepare_bc_params(params)   # padded once, reused every call

    out = bc_forward(x, prepared, tm_max=32)
    out = jax.block_until_ready(out)

    assert out.shape == (batch, actions)
    out_f32 = out.astype(jnp.float32)

    # tight check against a reference using the same bf16-operand math
    ref_bf16 = bc_reference_bf16(x, params).astype(jnp.bfloat16).astype(jnp.float32)
    assert jnp.allclose(out_f32, ref_bf16, atol=1e-2, rtol=1e-2)

    # loose sanity check against the pure-f32 PyTorch-equivalent math
    ref_f32 = bc_reference_f32(x, params)
    assert jnp.allclose(out_f32, ref_f32, atol=1.5e-1, rtol=1.5e-1)

    print("KERNEL_OK")
</pallas_src>

<mosaic_0001>
module attributes {stable_mosaic.version = 11 : i64} {
  func.func @bc_mlp_kernel(%arg0: i32, %arg1: memref<32x128xbf16, #tpu.memory_space<vmem>>, %arg2: memref<128x128xbf16, #tpu.memory_space<vmem>>, %arg3: memref<1x128xf32, #tpu.memory_space<vmem>>, %arg4: memref<128x128xbf16, #tpu.memory_space<vmem>>, %arg5: memref<1x128xf32, #tpu.memory_space<vmem>>, %arg6: memref<128x128xbf16, #tpu.memory_space<vmem>>, %arg7: memref<1x128xf32, #tpu.memory_space<vmem>>, %arg8: memref<128x128xbf16, #tpu.memory_space<vmem>>, %arg9: memref<1x128xf32, #tpu.memory_space<vmem>>, %arg10: memref<128x128xbf16, #tpu.memory_space<vmem>>, %arg11: memref<1x128xf32, #tpu.memory_space<vmem>>, %arg12: memref<32x128xbf16, #tpu.memory_space<vmem>>) attributes {dimension_semantics = [#tpu.dimension_semantics<parallel>], iteration_bounds = array<i64: 2>, scalar_prefetch = 0 : i64, scratch_operands = 0 : i64, tpu.core_type = #tpu.core_type<tc>, window_params = [{transform_indices = @transform_0, window_bounds = array<i64: 32, 128>}, {pipeline_mode = #tpu.pipeline_mode<synchronous>, transform_indices = @transform_1, window_bounds = array<i64: 128, 128>}, {pipeline_mode = #tpu.pipeline_mode<synchronous>, transform_indices = @transform_2, window_bounds = array<i64: 1, 128>}, {pipeline_mode = #tpu.pipeline_mode<synchronous>, transform_indices = @transform_3, window_bounds = array<i64: 128, 128>}, {pipeline_mode = #tpu.pipeline_mode<synchronous>, transform_indices = @transform_4, window_bounds = array<i64: 1, 128>}, {pipeline_mode = #tpu.pipeline_mode<synchronous>, transform_indices = @transform_5, window_bounds = array<i64: 128, 128>}, {pipeline_mode = #tpu.pipeline_mode<synchronous>, transform_indices = @transform_6, window_bounds = array<i64: 1, 128>}, {pipeline_mode = #tpu.pipeline_mode<synchronous>, transform_indices = @transform_7, window_bounds = array<i64: 128, 128>}, {pipeline_mode = #tpu.pipeline_mode<synchronous>, transform_indices = @transform_8, window_bounds = array<i64: 1, 128>}, {pipeline_mode = #tpu.pipeline_mode<synchronous>, transform_indices = @transform_9, window_bounds = array<i64: 128, 128>}, {pipeline_mode = #tpu.pipeline_mode<synchronous>, transform_indices = @transform_10, window_bounds = array<i64: 1, 128>}, {transform_indices = @transform_11, window_bounds = array<i64: 32, 128>}]} {
    %c0 = arith.constant 0 : index
    %c0_0 = arith.constant 0 : index
    %0 = vector.load %arg1[%c0, %c0_0] : memref<32x128xbf16, #tpu.memory_space<vmem>>, vector<16x128xbf16>
    %c16 = arith.constant 16 : index
    %c0_1 = arith.constant 0 : index
    %1 = vector.load %arg1[%c16, %c0_1] : memref<32x128xbf16, #tpu.memory_space<vmem>>, vector<16x128xbf16>
    %c0_2 = arith.constant 0 : index
    %c0_3 = arith.constant 0 : index
    %2 = vector.load %arg2[%c0_2, %c0_3] : memref<128x128xbf16, #tpu.memory_space<vmem>>, vector<128x128xbf16>
    %c0_4 = arith.constant 0 : index
    %c0_5 = arith.constant 0 : index
    %3 = vector.load %arg3[%c0_4, %c0_5] : memref<1x128xf32, #tpu.memory_space<vmem>>, vector<1x128xf32>
    %cst = arith.constant dense<0.000000e+00> : vector<16x128xf32>
    %4 = tpu.matmul %0, %2, %cst {dimension_numbers = #tpu.dot_dimension_numbers<[1], [0], [0], [1], [0, 0, 1, 1], [], []>} : vector<16x128xbf16>, vector<128x128xbf16>, vector<16x128xf32> -> vector<16x128xf32>
    %cst_6 = arith.constant dense<0.000000e+00> : vector<16x128xf32>
    %5 = tpu.matmul %1, %2, %cst_6 {dimension_numbers = #tpu.dot_dimension_numbers<[1], [0], [0], [1], [0, 0, 1, 1], [], []>} : vector<16x128xbf16>, vector<128x128xbf16>, vector<16x128xf32> -> vector<16x128xf32>
    %6 = vector.broadcast %3 : vector<1x128xf32> to vector<16x128xf32>
    %7 = arith.addf %4, %6 : vector<16x128xf32>
    %cst_7 = arith.constant 0.00999999977 : f32
    %8 = vector.broadcast %cst_7 : f32 to vector<16x128xf32>
    %9 = arith.mulf %8, %7 : vector<16x128xf32>
    %10 = arith.maximumf %7, %9 : vector<16x128xf32>
    %11 = vector.broadcast %3 : vector<1x128xf32> to vector<16x128xf32>
    %12 = arith.addf %5, %11 : vector<16x128xf32>
    %cst_8 = arith.constant 0.00999999977 : f32
    %13 = vector.broadcast %cst_8 : f32 to vector<16x128xf32>
    %14 = arith.mulf %13, %12 : vector<16x128xf32>
    %15 = arith.maximumf %12, %14 : vector<16x128xf32>
    %16 = arith.truncf %10 : vector<16x128xf32> to vector<16x128xbf16>
    %17 = arith.truncf %15 : vector<16x128xf32> to vector<16x128xbf16>
    %c0_9 = arith.constant 0 : index
    %c0_10 = arith.constant 0 : index
    %18 = vector.load %arg4[%c0_9, %c0_10] : memref<128x128xbf16, #tpu.memory_space<vmem>>, vector<128x128xbf16>
    %c0_11 = arith.constant 0 : index
    %c0_12 = arith.constant 0 : index
    %19 = vector.load %arg5[%c0_11, %c0_12] : memref<1x128xf32, #tpu.memory_space<vmem>>, vector<1x128xf32>
    %cst_13 = arith.constant dense<0.000000e+00> : vector<16x128xf32>
    %20 = tpu.matmul %16, %18, %cst_13 {dimension_numbers = #tpu.dot_dimension_numbers<[1], [0], [0], [1], [0, 0, 1, 1], [], []>} : vector<16x128xbf16>, vector<128x128xbf16>, vector<16x128xf32> -> vector<16x128xf32>
    %cst_14 = arith.constant dense<0.000000e+00> : vector<16x128xf32>
    %21 = tpu.matmul %17, %18, %cst_14 {dimension_numbers = #tpu.dot_dimension_numbers<[1], [0], [0], [1], [0, 0, 1, 1], [], []>} : vector<16x128xbf16>, vector<128x128xbf16>, vector<16x128xf32> -> vector<16x128xf32>
    %22 = vector.broadcast %19 : vector<1x128xf32> to vector<16x128xf32>
    %23 = arith.addf %20, %22 : vector<16x128xf32>
    %cst_15 = arith.constant 0.00999999977 : f32
    %24 = vector.broadcast %cst_15 : f32 to vector<16x128xf32>
    %25 = arith.mulf %24, %23 : vector<16x128xf32>
    %26 = arith.maximumf %23, %25 : vector<16x128xf32>
    %27 = vector.broadcast %19 : vector<1x128xf32> to vector<16x128xf32>
    %28 = arith.addf %21, %27 : vector<16x128xf32>
    %cst_16 = arith.constant 0.00999999977 : f32
    %29 = vector.broadcast %cst_16 : f32 to vector<16x128xf32>
    %30 = arith.mulf %29, %28 : vector<16x128xf32>
    %31 = arith.maximumf %28, %30 : vector<16x128xf32>
    %32 = arith.truncf %26 : vector<16x128xf32> to vector<16x128xbf16>
    %33 = arith.truncf %31 : vector<16x128xf32> to vector<16x128xbf16>
    %c0_17 = arith.constant 0 : index
    %c0_18 = arith.constant 0 : index
    %34 = vector.load %arg6[%c0_17, %c0_18] : memref<128x128xbf16, #tpu.memory_space<vmem>>, vector<128x128xbf16>
    %c0_19 = arith.constant 0 : index
    %c0_20 = arith.constant 0 : index
    %35 = vector.load %arg7[%c0_19, %c0_20] : memref<1x128xf32, #tpu.memory_space<vmem>>, vector<1x128xf32>
    %cst_21 = arith.constant dense<0.000000e+00> : vector<16x128xf32>
    %36 = tpu.matmul %32, %34, %cst_21 {dimension_numbers = #tpu.dot_dimension_numbers<[1], [0], [0], [1], [0, 0, 1, 1], [], []>} : vector<16x128xbf16>, vector<128x128xbf16>, vector<16x128xf32> -> vector<16x128xf32>
    %cst_22 = arith.constant dense<0.000000e+00> : vector<16x128xf32>
    %37 = tpu.matmul %33, %34, %cst_22 {dimension_numbers = #tpu.dot_dimension_numbers<[1], [0], [0], [1], [0, 0, 1, 1], [], []>} : vector<16x128xbf16>, vector<128x128xbf16>, vector<16x128xf32> -> vector<16x128xf32>
    %38 = vector.broadcast %35 : vector<1x128xf32> to vector<16x128xf32>
    %39 = arith.addf %36, %38 : vector<16x128xf32>
    %cst_23 = arith.constant 0.00999999977 : f32
    %40 = vector.broadcast %cst_23 : f32 to vector<16x128xf32>
    %41 = arith.mulf %40, %39 : vector<16x128xf32>
    %42 = arith.maximumf %39, %41 : vector<16x128xf32>
    %43 = vector.broadcast %35 : vector<1x128xf32> to vector<16x128xf32>
    %44 = arith.addf %37, %43 : vector<16x128xf32>
    %cst_24 = arith.constant 0.00999999977 : f32
    %45 = vector.broadcast %cst_24 : f32 to vector<16x128xf32>
    %46 = arith.mulf %45, %44 : vector<16x128xf32>
    %47 = arith.maximumf %44, %46 : vector<16x128xf32>
    %48 = arith.truncf %42 : vector<16x128xf32> to vector<16x128xbf16>
    %49 = arith.truncf %47 : vector<16x128xf32> to vector<16x128xbf16>
    %c0_25 = arith.constant 0 : index
    %c0_26 = arith.constant 0 : index
    %50 = vector.load %arg8[%c0_25, %c0_26] : memref<128x128xbf16, #tpu.memory_space<vmem>>, vector<128x128xbf16>
    %c0_27 = arith.constant 0 : index
    %c0_28 = arith.constant 0 : index
    %51 = vector.load %arg9[%c0_27, %c0_28] : memref<1x128xf32, #tpu.memory_space<vmem>>, vector<1x128xf32>
    %cst_29 = arith.constant dense<0.000000e+00> : vector<16x128xf32>
    %52 = tpu.matmul %48, %50, %cst_29 {dimension_numbers = #tpu.dot_dimension_numbers<[1], [0], [0], [1], [0, 0, 1, 1], [], []>} : vector<16x128xbf16>, vector<128x128xbf16>, vector<16x128xf32> -> vector<16x128xf32>
    %cst_30 = arith.constant dense<0.000000e+00> : vector<16x128xf32>
    %53 = tpu.matmul %49, %50, %cst_30 {dimension_numbers = #tpu.dot_dimension_numbers<[1], [0], [0], [1], [0, 0, 1, 1], [], []>} : vector<16x128xbf16>, vector<128x128xbf16>, vector<16x128xf32> -> vector<16x128xf32>
    %54 = vector.broadcast %51 : vector<1x128xf32> to vector<16x128xf32>
    %55 = arith.addf %52, %54 : vector<16x128xf32>
    %cst_31 = arith.constant 0.00999999977 : f32
    %56 = vector.broadcast %cst_31 : f32 to vector<16x128xf32>
    %57 = arith.mulf %56, %55 : vector<16x128xf32>
    %58 = arith.maximumf %55, %57 : vector<16x128xf32>
    %59 = vector.broadcast %51 : vector<1x128xf32> to vector<16x128xf32>
    %60 = arith.addf %53, %59 : vector<16x128xf32>
    %cst_32 = arith.constant 0.00999999977 : f32
    %61 = vector.broadcast %cst_32 : f32 to vector<16x128xf32>
    %62 = arith.mulf %61, %60 : vector<16x128xf32>
    %63 = arith.maximumf %60, %62 : vector<16x128xf32>
    %64 = arith.truncf %58 : vector<16x128xf32> to vector<16x128xbf16>
    %65 = arith.truncf %63 : vector<16x128xf32> to vector<16x128xbf16>
    %c0_33 = arith.constant 0 : index
    %c0_34 = arith.constant 0 : index
    %66 = vector.load %arg10[%c0_33, %c0_34] : memref<128x128xbf16, #tpu.memory_space<vmem>>, vector<128x128xbf16>
    %c0_35 = arith.constant 0 : index
    %c0_36 = arith.constant 0 : index
    %67 = vector.load %arg11[%c0_35, %c0_36] : memref<1x128xf32, #tpu.memory_space<vmem>>, vector<1x128xf32>
    %cst_37 = arith.constant dense<0.000000e+00> : vector<16x128xf32>
    %68 = tpu.matmul %64, %66, %cst_37 {dimension_numbers = #tpu.dot_dimension_numbers<[1], [0], [0], [1], [0, 0, 1, 1], [], []>} : vector<16x128xbf16>, vector<128x128xbf16>, vector<16x128xf32> -> vector<16x128xf32>
    %cst_38 = arith.constant dense<0.000000e+00> : vector<16x128xf32>
    %69 = tpu.matmul %65, %66, %cst_38 {dimension_numbers = #tpu.dot_dimension_numbers<[1], [0], [0], [1], [0, 0, 1, 1], [], []>} : vector<16x128xbf16>, vector<128x128xbf16>, vector<16x128xf32> -> vector<16x128xf32>
    %70 = vector.broadcast %67 : vector<1x128xf32> to vector<16x128xf32>
    %71 = arith.addf %68, %70 : vector<16x128xf32>
    %cst_39 = arith.constant 0.00999999977 : f32
    %72 = vector.broadcast %cst_39 : f32 to vector<16x128xf32>
    %73 = arith.mulf %72, %71 : vector<16x128xf32>
    %74 = arith.maximumf %71, %73 : vector<16x128xf32>
    %75 = vector.broadcast %67 : vector<1x128xf32> to vector<16x128xf32>
    %76 = arith.addf %69, %75 : vector<16x128xf32>
    %cst_40 = arith.constant 0.00999999977 : f32
    %77 = vector.broadcast %cst_40 : f32 to vector<16x128xf32>
    %78 = arith.mulf %77, %76 : vector<16x128xf32>
    %79 = arith.maximumf %76, %78 : vector<16x128xf32>
    %80 = arith.truncf %74 : vector<16x128xf32> to vector<16x128xbf16>
    %c0_41 = arith.constant 0 : index
    %c0_42 = arith.constant 0 : index
    %81 = vector.load %arg12[%c0_41, %c0_42] : memref<32x128xbf16, #tpu.memory_space<vmem>>, vector<16x128xbf16>
    tpu.vector_store %arg12[%c0_41, %c0_42], %80 {strides = array<i32>} : memref<32x128xbf16, #tpu.memory_space<vmem>>, vector<16x128xbf16>,
    %82 = arith.truncf %79 : vector<16x128xf32> to vector<16x128xbf16>
    %c16_43 = arith.constant 16 : index
    %c0_44 = arith.constant 0 : index
    %83 = vector.load %arg12[%c16_43, %c0_44] : memref<32x128xbf16, #tpu.memory_space<vmem>>, vector<16x128xbf16>
    tpu.vector_store %arg12[%c16_43, %c0_44], %82 {strides = array<i32>} : memref<32x128xbf16, #tpu.memory_space<vmem>>, vector<16x128xbf16>,
    return
  }
  func.func @transform_0(%arg0: i32) -> (i32, i32) {
    %c0_i32 = arith.constant 0 : i32
    %c0_i32_0 = arith.constant 0 : i32
    return %arg0, %c0_i32 : i32, i32
  }
  func.func @transform_1(%arg0: i32) -> (i32, i32) {
    %c0_i32 = arith.constant 0 : i32
    %c0_i32_0 = arith.constant 0 : i32
    %c0_i32_1 = arith.constant 0 : i32
    return %c0_i32, %c0_i32_0 : i32, i32
  }
  func.func @transform_2(%arg0: i32) -> (i32, i32) {
    %c0_i32 = arith.constant 0 : i32
    %c0_i32_0 = arith.constant 0 : i32
    %c0_i32_1 = arith.constant 0 : i32
    return %c0_i32, %c0_i32_0 : i32, i32
  }
  func.func @transform_3(%arg0: i32) -> (i32, i32) {
    %c0_i32 = arith.constant 0 : i32
    %c0_i32_0 = arith.constant 0 : i32
    %c0_i32_1 = arith.constant 0 : i32
    return %c0_i32, %c0_i32_0 : i32, i32
  }
  func.func @transform_4(%arg0: i32) -> (i32, i32) {
    %c0_i32 = arith.constant 0 : i32
    %c0_i32_0 = arith.constant 0 : i32
    %c0_i32_1 = arith.constant 0 : i32
    return %c0_i32, %c0_i32_0 : i32, i32
  }
  func.func @transform_5(%arg0: i32) -> (i32, i32) {
    %c0_i32 = arith.constant 0 : i32
    %c0_i32_0 = arith.constant 0 : i32
    %c0_i32_1 = arith.constant 0 : i32
    return %c0_i32, %c0_i32_0 : i32, i32
  }
  func.func @transform_6(%arg0: i32) -> (i32, i32) {
    %c0_i32 = arith.constant 0 : i32
    %c0_i32_0 = arith.constant 0 : i32
    %c0_i32_1 = arith.constant 0 : i32
    return %c0_i32, %c0_i32_0 : i32, i32
  }
  func.func @transform_7(%arg0: i32) -> (i32, i32) {
    %c0_i32 = arith.constant 0 : i32
    %c0_i32_0 = arith.constant 0 : i32
    %c0_i32_1 = arith.constant 0 : i32
    return %c0_i32, %c0_i32_0 : i32, i32
  }
  func.func @transform_8(%arg0: i32) -> (i32, i32) {
    %c0_i32 = arith.constant 0 : i32
    %c0_i32_0 = arith.constant 0 : i32
    %c0_i32_1 = arith.constant 0 : i32
    return %c0_i32, %c0_i32_0 : i32, i32
  }
  func.func @transform_9(%arg0: i32) -> (i32, i32) {
    %c0_i32 = arith.constant 0 : i32
    %c0_i32_0 = arith.constant 0 : i32
    %c0_i32_1 = arith.constant 0 : i32
    return %c0_i32, %c0_i32_0 : i32, i32
  }
  func.func @transform_10(%arg0: i32) -> (i32, i32) {
    %c0_i32 = arith.constant 0 : i32
    %c0_i32_0 = arith.constant 0 : i32
    %c0_i32_1 = arith.constant 0 : i32
    return %c0_i32, %c0_i32_0 : i32, i32
  }
  func.func @transform_11(%arg0: i32) -> (i32, i32) {
    %c0_i32 = arith.constant 0 : i32
    %c0_i32_0 = arith.constant 0 : i32
    return %arg0, %c0_i32 : i32, i32
  }
}

</mosaic_0001>

<llo_original>
// kernel: tpu_custom_call.1
$region0: #{tpu_custom_call.1}
  #allocation0 [shape = 'u32[]', space=smem, size = 0x4, offset = 0x4, fixed_abs, tag = 'smem constant byte address 0x4 - core index']
  #allocation1 [shape = 'u32[144,128]{1,0:T(1,128)}', space=vmem, size = 0x12000, scoped, tag = 'internal scratch']
  %s0 = inlined_call_operand.hbm [shape: bf16[64,128], index: 0, kind: input, shape index: {}]
  %s1 = inlined_call_operand.hbm [shape: bf16[128,128], index: 1, kind: input, shape index: {}]
  %s2 = inlined_call_operand.vmem [shape: f32[1,128], index: 2, kind: input, shape index: {}]
  %s3 = inlined_call_operand.hbm [shape: bf16[128,128], index: 3, kind: input, shape index: {}]
  %s4 = inlined_call_operand.vmem [shape: f32[1,128], index: 4, kind: input, shape index: {}]
  %s5 = inlined_call_operand.hbm [shape: bf16[128,128], index: 5, kind: input, shape index: {}]
  %s6 = inlined_call_operand.vmem [shape: f32[1,128], index: 6, kind: input, shape index: {}]
  %s7 = inlined_call_operand.hbm [shape: bf16[128,128], index: 7, kind: input, shape index: {}]
  %s8 = inlined_call_operand.vmem [shape: f32[1,128], index: 8, kind: input, shape index: {}]
  %s9 = inlined_call_operand.hbm [shape: bf16[128,128], index: 9, kind: input, shape index: {}]
  %s10 = inlined_call_operand.vmem [shape: f32[1,128], index: 10, kind: input, shape index: {}]
  %s11 = inlined_call_operand.hbm [shape: bf16[64,128], index: 11, kind: output, shape index: {}]
  %s12 = sld [smem:[#allocation0]]
  $region101: #{tpu_custom_call.1} parent=0
    _
  %s14 = ssub.s32 1, %s12
  %s15 = scalar_select 0, %s14, %s12
  $region1: #{tpu_custom_call.1} parent=0
    #allocation2 [shape = 'u8[16384]{0}', space=vmem, size = 0x4000, scoped, tag = 'input window, operand 0']
    #allocation3 [shape = 's32[2]{0}', space=sflag, size = 0x8, scoped, tag = 'scoped memory for tpu_custom_call.1']
    #allocation4 [shape = 's32[2]{0}', space=sflag, size = 0x8, scoped, tag = 'scoped memory for tpu_custom_call.1']
    #allocation5 [shape = 'u8[32768]{0}', space=vmem, size = 0x8000, scoped, tag = 'input window, operand 1, single buffered']
    #allocation6 [shape = 's32[1]{0}', space=sflag, size = 0x4, scoped, tag = 'scoped memory for tpu_custom_call.1']
    #allocation7 [shape = 'u8[32768]{0}', space=vmem, size = 0x8000, scoped, tag = 'input window, operand 3, single buffered']
    #allocation8 [shape = 'u8[32768]{0}', space=vmem, size = 0x8000, scoped, tag = 'input window, operand 5, single buffered']
    #allocation9 [shape = 's32[1]{0}', space=sflag, size = 0x4, scoped, tag = 'scoped memory for tpu_custom_call.1']
    #allocation10 [shape = 'u8[32768]{0}', space=vmem, size = 0x8000, scoped, tag = 'input window, operand 7, single buffered']
    #allocation11 [shape = 'u8[32768]{0}', space=vmem, size = 0x8000, scoped, tag = 'input window, operand 9, single buffered']
    #allocation12 [shape = 's32[1]{0}', space=sflag, size = 0x4, scoped, tag = 'scoped memory for tpu_custom_call.1']
    #allocation13 [shape = 'u8[16384]{0}', space=vmem, size = 0x4000, scoped, tag = 'output window, operand 0']
    %16 = vsyncpa [#allocation3], 0
    %s17 = scalar_lea.sflag [#allocation3], 1
    %18 = vsyncpa %s17, 0
    %19 = vsyncpa [#allocation6], 0
    %20 = vsyncpa [#allocation9], 0
    %21 = vsyncpa [#allocation12], 0
    %22 = vsyncpa [#allocation4], 0
    %s23 = scalar_lea.sflag [#allocation4], 1
    %24 = vsyncpa %s23, 0
    loop: start=0, step=1, limit=4
    $region2: #{tpu_custom_call.1} parent=1 // loop_pre_header
      _
    $region3: #{tpu_custom_call.1} parent=1 // loop_header
      %s26 = sphi 0, %s30
      %p27 = scmp.ge.s32.totalorder %s26, 4
      %s36 = sphi 0, %s38
      %s39 = sphi 0, %s36
      %s40 = sphi 0, %s39
      %s56 = sphi 0, %s40
      %s60 = sphi 0, %s60
      %s62 = sphi 0, %s60
      %s63 = sphi 0, %s62
      %s77 = sphi 0, %s63
      %s81 = sphi 0, %s81
      %s83 = sphi 0, %s81
      %s84 = sphi 0, %s83
      %s98 = sphi 0, %s84
      %s102 = sphi 0, %s102
      %s104 = sphi 0, %s102
      %s105 = sphi 0, %s104
      %s119 = sphi 0, %s105
      %s123 = sphi 0, %s123
      %s125 = sphi 0, %s123
      %s126 = sphi 0, %s125
      %s140 = sphi 0, %s126
      %s144 = sphi 0, %s144
      %s146 = sphi 0, %s144
      %s147 = sphi 0, %s146
      %s161 = sphi 0, %s147
      %s165 = sphi 0, %s165
      %s167 = sphi 0, %s165
      %s168 = sphi 0, %s167
      %s182 = sphi 0, %s168
      %s186 = sphi 0, %s186
      %s188 = sphi 0, %s186
      %s189 = sphi 0, %s188
      %s203 = sphi 0, %s189
      %s207 = sphi 0, %s207
      %s209 = sphi 0, %s207
      %s210 = sphi 0, %s209
      %s224 = sphi 0, %s210
      %s228 = sphi 0, %s228
      %s230 = sphi 0, %s228
      %s231 = sphi 0, %s230
      %s245 = sphi 0, %s231
      %s249 = sphi 0, %s249
      %s251 = sphi 0, %s249
      %s252 = sphi 0, %s251
      %s266 = sphi 0, %s252
      %s272 = sphi 0, %s274
      %s275 = sphi 0, %s272
      %s276 = sphi 0, %s275
      %s292 = sphi 0, %s276
    $region4: #{tpu_custom_call.1} parent=1 // loop_header_branch
      %29 = sbr.rel (%p27) target = $region8
    $region5: #{tpu_custom_call.1} parent=1 // loop_body
      %s31 = ssub.s32 %s26, 1
      %s32 = ssub.s32 %s26, 2
      %s33 = sadd.s32 %s26, 1
      %s34 = ssub.s32 %s26, %s33
      %p35 = scmp.eq.s32.totalorder %s34, 0
      %s37 = sadd.s32 %s36, 1
      %s38 = scalar_select %p35, %s36, %s37
      %p41 = pneg %p35
      %p42 = scmp.eq.s32.totalorder %s26, 1
      %p43 = por %p41, %p42
      %p44 = scmp.ne.s32.totalorder %s36, %s39
      %p45 = scmp.eq.s32.totalorder %s26, 0
      %p46 = por %p44, %p45
      %p47 = scmp.ne.s32.totalorder %s36, %s39
      %p48 = scmp.eq.s32.totalorder %s31, 1
      %p49 = por %p47, %p48
      %p50 = scmp.ne.s32.totalorder %s39, %s40
      %p51 = scmp.eq.s32.totalorder %s31, 0
      %p52 = por %p50, %p51
      %p53 = scmp.ne.s32.totalorder %s39, %s40
      %p54 = scmp.eq.s32.totalorder %s32, 1
      %p55 = por %p53, %p54
      %p57 = scmp.ne.s32.totalorder %s40, %s56
      %p58 = scmp.eq.s32.totalorder %s32, 0
      %p59 = por %p57, %p58
      %s61 = sadd.s32 %s60, 1
      %p64 = scmp.eq.s32.totalorder %s26, 1
      %p65 = scmp.ne.s32.totalorder %s60, %s62
      %p66 = scmp.eq.s32.totalorder %s26, 0
      %p67 = por %p65, %p66
      %p68 = scmp.ne.s32.totalorder %s60, %s62
      %p69 = scmp.eq.s32.totalorder %s31, 1
      %p70 = por %p68, %p69
      %p71 = scmp.ne.s32.totalorder %s62, %s63
      %p72 = scmp.eq.s32.totalorder %s31, 0
      %p73 = por %p71, %p72
      %p74 = scmp.ne.s32.totalorder %s62, %s63
      %p75 = scmp.eq.s32.totalorder %s32, 1
      %p76 = por %p74, %p75
      %p78 = scmp.ne.s32.totalorder %s63, %s77
      %p79 = scmp.eq.s32.totalorder %s32, 0
      %p80 = por %p78, %p79
      %s82 = sadd.s32 %s81, 1
      %p85 = scmp.eq.s32.totalorder %s26, 1
      %p86 = scmp.ne.s32.totalorder %s81, %s83
      %p87 = scmp.eq.s32.totalorder %s26, 0
      %p88 = por %p86, %p87
      %p89 = scmp.ne.s32.totalorder %s81, %s83
      %p90 = scmp.eq.s32.totalorder %s31, 1
      %p91 = por %p89, %p90
      %p92 = scmp.ne.s32.totalorder %s83, %s84
      %p93 = scmp.eq.s32.totalorder %s31, 0
      %p94 = por %p92, %p93
      %p95 = scmp.ne.s32.totalorder %s83, %s84
      %p96 = scmp.eq.s32.totalorder %s32, 1
      %p97 = por %p95, %p96
      %p99 = scmp.ne.s32.totalorder %s84, %s98
      %p100 = scmp.eq.s32.totalorder %s32, 0
      %p101 = por %p99, %p100
      %s103 = sadd.s32 %s102, 1
      %p106 = scmp.eq.s32.totalorder %s26, 1
      %p107 = scmp.ne.s32.totalorder %s102, %s104
      %p108 = scmp.eq.s32.totalorder %s26, 0
      %p109 = por %p107, %p108
      %p110 = scmp.ne.s32.totalorder %s102, %s104
      %p111 = scmp.eq.s32.totalorder %s31, 1
      %p112 = por %p110, %p111
      %p113 = scmp.ne.s32.totalorder %s104, %s105
      %p114 = scmp.eq.s32.totalorder %s31, 0
      %p115 = por %p113, %p114
      %p116 = scmp.ne.s32.totalorder %s104, %s105
      %p117 = scmp.eq.s32.totalorder %s32, 1
      %p118 = por %p116, %p117
      %p120 = scmp.ne.s32.totalorder %s105, %s119
      %p121 = scmp.eq.s32.totalorder %s32, 0
      %p122 = por %p120, %p121
      %s124 = sadd.s32 %s123, 1
      %p127 = scmp.eq.s32.totalorder %s26, 1
      %p128 = scmp.ne.s32.totalorder %s123, %s125
      %p129 = scmp.eq.s32.totalorder %s26, 0
      %p130 = por %p128, %p129
      %p131 = scmp.ne.s32.totalorder %s123, %s125
      %p132 = scmp.eq.s32.totalorder %s31, 1
      %p133 = por %p131, %p132
      %p134 = scmp.ne.s32.totalorder %s125, %s126
      %p135 = scmp.eq.s32.totalorder %s31, 0
      %p136 = por %p134, %p135
      %p137 = scmp.ne.s32.totalorder %s125, %s126
      %p138 = scmp.eq.s32.totalorder %s32, 1
      %p139 = por %p137, %p138
      %p141 = scmp.ne.s32.totalorder %s126, %s140
      %p142 = scmp.eq.s32.totalorder %s32, 0
      %p143 = por %p141, %p142
      %s145 = sadd.s32 %s144, 1
      %p148 = scmp.eq.s32.totalorder %s26, 1
      %p149 = scmp.ne.s32.totalorder %s144, %s146
      %p150 = scmp.eq.s32.totalorder %s26, 0
      %p151 = por %p149, %p150
      %p152 = scmp.ne.s32.totalorder %s144, %s146
      %p153 = scmp.eq.s32.totalorder %s31, 1
      %p154 = por %p152, %p153
      %p155 = scmp.ne.s32.totalorder %s146, %s147
      %p156 = scmp.eq.s32.totalorder %s31, 0
      %p157 = por %p155, %p156
      %p158 = scmp.ne.s32.totalorder %s146, %s147
      %p159 = scmp.eq.s32.totalorder %s32, 1
      %p160 = por %p158, %p159
      %p162 = scmp.ne.s32.totalorder %s147, %s161
      %p163 = scmp.eq.s32.totalorder %s32, 0
      %p164 = por %p162, %p163
      %s166 = sadd.s32 %s165, 1
      %p169 = scmp.eq.s32.totalorder %s26, 1
      %p170 = scmp.ne.s32.totalorder %s165, %s167
      %p171 = scmp.eq.s32.totalorder %s26, 0
      %p172 = por %p170, %p171
      %p173 = scmp.ne.s32.totalorder %s165, %s167
      %p174 = scmp.eq.s32.totalorder %s31, 1
      %p175 = por %p173, %p174
      %p176 = scmp.ne.s32.totalorder %s167, %s168
      %p177 = scmp.eq.s32.totalorder %s31, 0
      %p178 = por %p176, %p177
      %p179 = scmp.ne.s32.totalorder %s167, %s168
      %p180 = scmp.eq.s32.totalorder %s32, 1
      %p181 = por %p179, %p180
      %p183 = scmp.ne.s32.totalorder %s168, %s182
      %p184 = scmp.eq.s32.totalorder %s32, 0
      %p185 = por %p183, %p184
      %s187 = sadd.s32 %s186, 1
      %p190 = scmp.eq.s32.totalorder %s26, 1
      %p191 = scmp.ne.s32.totalorder %s186, %s188
      %p192 = scmp.eq.s32.totalorder %s26, 0
      %p193 = por %p191, %p192
      %p194 = scmp.ne.s32.totalorder %s186, %s188
      %p195 = scmp.eq.s32.totalorder %s31, 1
      %p196 = por %p194, %p195
      %p197 = scmp.ne.s32.totalorder %s188, %s189
      %p198 = scmp.eq.s32.totalorder %s31, 0
      %p199 = por %p197, %p198
      %p200 = scmp.ne.s32.totalorder %s188, %s189
      %p201 = scmp.eq.s32.totalorder %s32, 1
      %p202 = por %p200, %p201
      %p204 = scmp.ne.s32.totalorder %s189, %s203
      %p205 = scmp.eq.s32.totalorder %s32, 0
      %p206 = por %p204, %p205
      %s208 = sadd.s32 %s207, 1
      %p211 = scmp.eq.s32.totalorder %s26, 1
      %p212 = scmp.ne.s32.totalorder %s207, %s209
      %p213 = scmp.eq.s32.totalorder %s26, 0
      %p214 = por %p212, %p213
      %p215 = scmp.ne.s32.totalorder %s207, %s209
      %p216 = scmp.eq.s32.totalorder %s31, 1
      %p217 = por %p215, %p216
      %p218 = scmp.ne.s32.totalorder %s209, %s210
      %p219 = scmp.eq.s32.totalorder %s31, 0
      %p220 = por %p218, %p219
      %p221 = scmp.ne.s32.totalorder %s209, %s210
      %p222 = scmp.eq.s32.totalorder %s32, 1
      %p223 = por %p221, %p222
      %p225 = scmp.ne.s32.totalorder %s210, %s224
      %p226 = scmp.eq.s32.totalorder %s32, 0
      %p227 = por %p225, %p226
      %s229 = sadd.s32 %s228, 1
      %p232 = scmp.eq.s32.totalorder %s26, 1
      %p233 = scmp.ne.s32.totalorder %s228, %s230
      %p234 = scmp.eq.s32.totalorder %s26, 0
      %p235 = por %p233, %p234
      %p236 = scmp.ne.s32.totalorder %s228, %s230
      %p237 = scmp.eq.s32.totalorder %s31, 1
      %p238 = por %p236, %p237
      %p239 = scmp.ne.s32.totalorder %s230, %s231
      %p240 = scmp.eq.s32.totalorder %s31, 0
      %p241 = por %p239, %p240
      %p242 = scmp.ne.s32.totalorder %s230, %s231
      %p243 = scmp.eq.s32.totalorder %s32, 1
      %p244 = por %p242, %p243
      %p246 = scmp.ne.s32.totalorder %s231, %s245
      %p247 = scmp.eq.s32.totalorder %s32, 0
      %p248 = por %p246, %p247
      %s250 = sadd.s32 %s249, 1
      %p253 = scmp.eq.s32.totalorder %s26, 1
      %p254 = scmp.ne.s32.totalorder %s249, %s251
      %p255 = scmp.eq.s32.totalorder %s26, 0
      %p256 = por %p254, %p255
      %p257 = scmp.ne.s32.totalorder %s249, %s251
      %p258 = scmp.eq.s32.totalorder %s31, 1
      %p259 = por %p257, %p258
      %p260 = scmp.ne.s32.totalorder %s251, %s252
      %p261 = scmp.eq.s32.totalorder %s31, 0
      %p262 = por %p260, %p261
      %p263 = scmp.ne.s32.totalorder %s251, %s252
      %p264 = scmp.eq.s32.totalorder %s32, 1
      %p265 = por %p263, %p264
      %p267 = scmp.ne.s32.totalorder %s252, %s266
      %p268 = scmp.eq.s32.totalorder %s32, 0
      %p269 = por %p267, %p268
      %s270 = ssub.s32 %s26, %s33
      %p271 = scmp.eq.s32.totalorder %s270, 0
      %s273 = sadd.s32 %s272, 1
      %s274 = scalar_select %p271, %s272, %s273
      %p277 = pneg %p271
      %p278 = scmp.eq.s32.totalorder %s26, 1
      %p279 = por %p277, %p278
      %p280 = scmp.ne.s32.totalorder %s272, %s275
      %p281 = scmp.eq.s32.totalorder %s26, 0
      %p282 = por %p280, %p281
      %p283 = scmp.ne.s32.totalorder %s272, %s275
      %p284 = scmp.eq.s32.totalorder %s31, 1
      %p285 = por %p283, %p284
      %p286 = scmp.ne.s32.totalorder %s275, %s276
      %p287 = scmp.eq.s32.totalorder %s31, 0
      %p288 = por %p286, %p287
      %p289 = scmp.ne.s32.totalorder %s275, %s276
      %p290 = scmp.eq.s32.totalorder %s32, 1
      %p291 = por %p289, %p290
      %p293 = scmp.ne.s32.totalorder %s276, %s292
      %p294 = scmp.eq.s32.totalorder %s32, 0
      %p295 = por %p293, %p294
      %p296 = scmp.le.s32.totalorder 1, %s26
      %p297 = scmp.lt.s32.totalorder %s26, 3
      %p298 = pnand %p296, %p297
      %p299 = pneg %p298
      // Predicated region
      $region9: #{tpu_custom_call.1} parent=5 // pred_check
        _
      $region10: #{tpu_custom_call.1} parent=5 // pred_check_branch
        %301 = sbr.rel (%p298) target = $region12
      $region11: #{tpu_custom_call.1} parent=5 // pred_region
        %s302 = ssub.s32 %s26, 1
        // Predicated region
        $region13: #{tpu_custom_call.1} parent=11 // pred_check
          %p303 = pneg %p73
        $region14: #{tpu_custom_call.1} parent=11 // pred_check_branch
          %305 = sbr.rel (%p303) target = $region16
        $region15: #{tpu_custom_call.1} parent=11 // pred_region
          %s307 = ssub.s32 1024, 1024
          %308 = vsyncadd [#allocation6], %s307
          %s309 = sshll.u32 [#allocation5], 4
          %s310 = int_to_ptr.vmem [resolvable:$true] %s309
          %315 = dma.hbm_to_vmem [thread:$0]  %s1, 1024, %s310, [#allocation6], 64, 64, 4
        $region16: #{tpu_custom_call.1} parent=11 // pred_fallthru
          _
        // Predicated region
        $region17: #{tpu_custom_call.1} parent=11 // pred_check
          %p316 = pneg %p94
        $region18: #{tpu_custom_call.1} parent=11 // pred_check_branch
          %318 = sbr.rel (%p316) target = $region20
        $region19: #{tpu_custom_call.1} parent=11 // pred_region
          _
        $region20: #{tpu_custom_call.1} parent=11 // pred_fallthru
          _
        // Predicated region
        $region21: #{tpu_custom_call.1} parent=11 // pred_check
          %p319 = pneg %p115
        $region22: #{tpu_custom_call.1} parent=11 // pred_check_branch
          %321 = sbr.rel (%p319) target = $region24
        $region23: #{tpu_custom_call.1} parent=11 // pred_region
          %s323 = ssub.s32 1024, 1024
          %324 = vsyncadd [#allocation6], %s323
          %s325 = sshll.u32 [#allocation7], 4
          %s326 = int_to_ptr.vmem [resolvable:$true] %s325
          %331 = dma.hbm_to_vmem [thread:$0]  %s3, 1024, %s326, [#allocation6], 64, 64, 4
        $region24: #{tpu_custom_call.1} parent=11 // pred_fallthru
          _
        // Predicated region
        $region25: #{tpu_custom_call.1} parent=11 // pred_check
          %p332 = pneg %p136
        $region26: #{tpu_custom_call.1} parent=11 // pred_check_branch
          %334 = sbr.rel (%p332) target = $region28
        $region27: #{tpu_custom_call.1} parent=11 // pred_region
          _
        $region28: #{tpu_custom_call.1} parent=11 // pred_fallthru
          _
        // Predicated region
        $region29: #{tpu_custom_call.1} parent=11 // pred_check
          %p335 = pneg %p157
        $region30: #{tpu_custom_call.1} parent=11 // pred_check_branch
          %337 = sbr.rel (%p335) target = $region32
        $region31: #{tpu_custom_call.1} parent=11 // pred_region
          %s339 = ssub.s32 1024, 1024
          %340 = vsyncadd [#allocation9], %s339
          %s341 = sshll.u32 [#allocation8], 4
          %s342 = int_to_ptr.vmem [resolvable:$true] %s341
          %347 = dma.hbm_to_vmem [thread:$0]  %s5, 1024, %s342, [#allocation9], 64, 64, 4
        $region32: #{tpu_custom_call.1} parent=11 // pred_fallthru
          _
        // Predicated region
        $region33: #{tpu_custom_call.1} parent=11 // pred_check
          %p348 = pneg %p178
        $region34: #{tpu_custom_call.1} parent=11 // pred_check_branch
          %350 = sbr.rel (%p348) target = $region36
        $region35: #{tpu_custom_call.1} parent=11 // pred_region
          _
        $region36: #{tpu_custom_call.1} parent=11 // pred_fallthru
          _
        // Predicated region
        $region37: #{tpu_custom_call.1} parent=11 // pred_check
          %p351 = pneg %p199
        $region38: #{tpu_custom_call.1} parent=11 // pred_check_branch
          %353 = sbr.rel (%p351) target = $region40
        $region39: #{tpu_custom_call.1} parent=11 // pred_region
          %s355 = ssub.s32 1024, 1024
          %356 = vsyncadd [#allocation9], %s355
          %s357 = sshll.u32 [#allocation10], 4
          %s358 = int_to_ptr.vmem [resolvable:$true] %s357
          %363 = dma.hbm_to_vmem [thread:$0]  %s7, 1024, %s358, [#allocation9], 64, 64, 4
        $region40: #{tpu_custom_call.1} parent=11 // pred_fallthru
          _
        // Predicated region
        $region41: #{tpu_custom_call.1} parent=11 // pred_check
          %p364 = pneg %p220
        $region42: #{tpu_custom_call.1} parent=11 // pred_check_branch
          %366 = sbr.rel (%p364) target = $region44
        $region43: #{tpu_custom_call.1} parent=11 // pred_region
          _
        $region44: #{tpu_custom_call.1} parent=11 // pred_fallthru
          _
        // Predicated region
        $region45: #{tpu_custom_call.1} parent=11 // pred_check
          %p367 = pneg %p241
        $region46: #{tpu_custom_call.1} parent=11 // pred_check_branch
          %369 = sbr.rel (%p367) target = $region48
        $region47: #{tpu_custom_call.1} parent=11 // pred_region
          %s371 = ssub.s32 1024, 1024
          %372 = vsyncadd [#allocation12], %s371
          %s373 = sshll.u32 [#allocation11], 4
          %s374 = int_to_ptr.vmem [resolvable:$true] %s373
          %379 = dma.hbm_to_vmem [thread:$0]  %s9, 1024, %s374, [#allocation12], 64, 64, 4
        $region48: #{tpu_custom_call.1} parent=11 // pred_fallthru
          _
        // Predicated region
        $region49: #{tpu_custom_call.1} parent=11 // pred_check
          %p380 = pneg %p262
        $region50: #{tpu_custom_call.1} parent=11 // pred_check_branch
          %382 = sbr.rel (%p380) target = $region52
        $region51: #{tpu_custom_call.1} parent=11 // pred_region
          _
        $region52: #{tpu_custom_call.1} parent=11 // pred_fallthru
          _
      $region12: #{tpu_custom_call.1} parent=5 // pred_fallthru
        _
      %p383 = scmp.lt.s32.totalorder %s26, 2
      // Predicated region
      $region53: #{tpu_custom_call.1} parent=5 // pred_check
        %p384 = pneg %p383
      $region54: #{tpu_custom_call.1} parent=5 // pred_check_branch
        %386 = sbr.rel (%p384) target = $region56
      $region55: #{tpu_custom_call.1} parent=5 // pred_region
        // Predicated region
        $region57: #{tpu_custom_call.1} parent=55 // pred_check
          %p387 = pneg %p46
        $region58: #{tpu_custom_call.1} parent=55 // pred_check_branch
          %389 = sbr.rel (%p387) target = $region60
        $region59: #{tpu_custom_call.1} parent=55 // pred_region
          %s390 = sand.u32 %s36, 1
          %s391 = scalar_lea.sflag [#allocation3], %s390
          %s392 = sand.u32 %s36, 1
          %s393 = smul.addr %s392, 16
          %s394 = scalar_lea.vmem [#allocation2], %s393
          %s395 = smul.u32 4, %s26
          %s397 = ssub.s32 256, 256
          %398 = vsyncadd %s391, %s397
          %s399 = smul.addr %s395, 64
          %s400 = scalar_lea.hbm %s0, %s399
          %s401 = sshll.u32 %s394, 4
          %s402 = int_to_ptr.vmem [resolvable:$true] %s401
          %407 = dma.hbm_to_vmem [thread:$0]  %s400, 256, %s402, %s391, 64, 64, 4
        $region60: #{tpu_custom_call.1} parent=55 // pred_fallthru
          _
      $region56: #{tpu_custom_call.1} parent=5 // pred_fallthru
        _
      %p408 = scmp.le.s32.totalorder 1, %s26
      %p409 = scmp.lt.s32.totalorder %s26, 3
      %p410 = pnand %p408, %p409
      %p411 = pneg %p410
      // Predicated region
      $region61: #{tpu_custom_call.1} parent=5 // pred_check
        _
      $region62: #{tpu_custom_call.1} parent=5 // pred_check_branch
        %413 = sbr.rel (%p410) target = $region64
      $region63: #{tpu_custom_call.1} parent=5 // pred_region
        %s414 = ssub.s32 %s26, 1
        %s415 = sand.u32 %s39, 1
        %s416 = scalar_lea.sflag [#allocation3], %s415
        %s417 = sand.u32 %s39, 1
        %s418 = smul.addr %s417, 16
        %s419 = scalar_lea.vmem [#allocation2], %s418
        // Predicated region
        $region65: #{tpu_custom_call.1} parent=63 // pred_check
          %p420 = pneg %p52
        $region66: #{tpu_custom_call.1} parent=63 // pred_check_branch
          %422 = sbr.rel (%p420) target = $region68
        $region67: #{tpu_custom_call.1} parent=63 // pred_region
          %423 = dma.done %s416, 256
        $region68: #{tpu_custom_call.1} parent=63 // pred_fallthru
          _
        // Predicated region
        $region69: #{tpu_custom_call.1} parent=63 // pred_check
          %p424 = pneg %p73
        $region70: #{tpu_custom_call.1} parent=63 // pred_check_branch
          %426 = sbr.rel (%p424) target = $region72
        $region71: #{tpu_custom_call.1} parent=63 // pred_region
          %427 = dma.done [#allocation6], 1024
        $region72: #{tpu_custom_call.1} parent=63 // pred_fallthru
          _
        // Predicated region
        $region73: #{tpu_custom_call.1} parent=63 // pred_check
          %p428 = pneg %p115
        $region74: #{tpu_custom_call.1} parent=63 // pred_check_branch
          %430 = sbr.rel (%p428) target = $region76
        $region75: #{tpu_custom_call.1} parent=63 // pred_region
          %431 = dma.done [#allocation6], 1024
        $region76: #{tpu_custom_call.1} parent=63 // pred_fallthru
          _
        // Predicated region
        $region77: #{tpu_custom_call.1} parent=63 // pred_check
          %p432 = pneg %p157
        $region78: #{tpu_custom_call.1} parent=63 // pred_check_branch
          %434 = sbr.rel (%p432) target = $region80
        $region79: #{tpu_custom_call.1} parent=63 // pred_region
          %435 = dma.done [#allocation9], 1024
        $region80: #{tpu_custom_call.1} parent=63 // pred_fallthru
          _
        // Predicated region
        $region81: #{tpu_custom_call.1} parent=63 // pred_check
          %p436 = pneg %p199
        $region82: #{tpu_custom_call.1} parent=63 // pred_check_branch
          %438 = sbr.rel (%p436) target = $region84
        $region83: #{tpu_custom_call.1} parent=63 // pred_region
          %439 = dma.done [#allocation9], 1024
        $region84: #{tpu_custom_call.1} parent=63 // pred_fallthru
          _
        // Predicated region
        $region85: #{tpu_custom_call.1} parent=63 // pred_check
          %p440 = pneg %p241
        $region86: #{tpu_custom_call.1} parent=63 // pred_check_branch
          %442 = sbr.rel (%p440) target = $region88
        $region87: #{tpu_custom_call.1} parent=63 // pred_region
          %443 = dma.done [#allocation12], 1024
        $region88: #{tpu_custom_call.1} parent=63 // pred_fallthru
          _
        %s444 = sand.u32 %s39, 1
        %s445 = scalar_lea.sflag [#allocation3], %s444
        %s446 = sand.u32 %s39, 1
        %s447 = smul.addr %s446, 16
        %s448 = scalar_lea.vmem [#allocation2], %s447
        %p449 = pneg %p52
        %p450 = pneg %p49
        %p451 = pneg %p73
        %p452 = pneg %p70
        %p453 = pneg %p94
        %p454 = pneg %p91
        %p455 = pneg %p115
        %p456 = pneg %p112
        %p457 = pneg %p136
        %p458 = pneg %p133
        %p459 = pneg %p157
        %p460 = pneg %p154
        %p461 = pneg %p178
        %p462 = pneg %p175
        %p463 = pneg %p199
        %p464 = pneg %p196
        %p465 = pneg %p220
        %p466 = pneg %p217
        %p467 = pneg %p241
        %p468 = pneg %p238
        %p469 = pneg %p262
        %p470 = pneg %p259
        %p471 = pneg %p288
        %p472 = pneg %p285
        %s473 = sand.u32 %s275, 1
        %s474 = scalar_lea.sflag [#allocation4], %s473
        %s475 = sand.u32 %s275, 1
        %s476 = smul.addr %s475, 16
        %s477 = scalar_lea.vmem [#allocation13], %s476
        %s478 = smul.u32 4, %s31
        %s479 = smul.u32 4, %s31
        %v481 = vld [vmem:[%s419] sm:$0xf]
        %v482 = vld [vmem:[%s419 + $0x4] sm:$0xf]
        %v483 = vld [vmem:[%s419 + $0x8] sm:$0xf]
        %v484 = vld [vmem:[%s419 + $0xc] sm:$0xf]
        %v485 = vld [vmem:[#allocation5] sm:$0xf]
        %v486 = vld [vmem:[#allocation5 + $0x4] sm:$0xf]
        %v487 = vld [vmem:[#allocation5 + $0x8] sm:$0xf]
        %v488 = vld [vmem:[#allocation5 + $0xc] sm:$0xf]
        %v489 = vld [vmem:[#allocation5 + $0x10] sm:$0xf]
        %v490 = vld [vmem:[#allocation5 + $0x14] sm:$0xf]
        %v491 = vld [vmem:[#allocation5 + $0x18] sm:$0xf]
        %v492 = vld [vmem:[#allocation5 + $0x1c] sm:$0xf]
        %v493 = vld [vmem:[#allocation5 + $0x20] sm:$0xf]
        %v494 = vld [vmem:[#allocation5 + $0x24] sm:$0xf]
        %v495 = vld [vmem:[#allocation5 + $0x28] sm:$0xf]
        %v496 = vld [vmem:[#allocation5 + $0x2c] sm:$0xf]
        %v497 = vld [vmem:[#allocation5 + $0x30] sm:$0xf]
        %v498 = vld [vmem:[#allocation5 + $0x34] sm:$0xf]
        %v499 = vld [vmem:[#allocation5 + $0x38] sm:$0xf]
        %v500 = vld [vmem:[#allocation5 + $0x3c] sm:$0xf]
        %v501 = vld [vmem:[%s2] sm:$0x1]
        %v503 = vlaneseq
        %v504 = vshrl.u32 %v503, 7
        %v505 = vsub.s32 0, %v504
        %v506 = vrot.slane %v501, %v505
        %v510 = vunpack.c.l.b16 %v481
        %v511 = vunpack.c.l.b16 %v482
        %v512 = vpack.c.b16 %v511, %v510
        %v530 = vunpack.c.l.b16 %v485
        %v531 = vunpack.c.l.b16 %v486
        %v532 = vunpack.c.l.b16 %v487
        %v533 = vunpack.c.l.b16 %v488
        %v534 = vunpack.c.l.b16 %v489
        %v535 = vunpack.c.l.b16 %v490
        %v536 = vunpack.c.l.b16 %v491
        %v537 = vunpack.c.l.b16 %v492
        %v538 = vunpack.c.l.b16 %v493
        %v539 = vunpack.c.l.b16 %v494
        %v540 = vunpack.c.l.b16 %v495
        %v541 = vunpack.c.l.b16 %v496
        %v542 = vunpack.c.l.b16 %v497
        %v543 = vunpack.c.l.b16 %v498
        %v544 = vunpack.c.l.b16 %v499
        %v545 = vunpack.c.l.b16 %v500
        %v546 = vpack.c.b16 %v531, %v530
        %v547 = vpack.c.b16 %v533, %v532
        %v548 = vpack.c.b16 %v535, %v534
        %v549 = vpack.c.b16 %v537, %v536
        %v550 = vpack.c.b16 %v539, %v538
        %v551 = vpack.c.b16 %v541, %v540
        %v552 = vpack.c.b16 %v543, %v542
        %v553 = vpack.c.b16 %v545, %v544
        %562 = vmatprep.subr.bf16.mxu0 0
        %563 = vmatpush1.bf16.msra.mxu0 %v546
        %564 = vmatprep.subr.bf16.mxu0 0
        %565 = vmatpush1.bf16.msra.mxu0 %v547
        %566 = vmatprep.subr.bf16.mxu0 0
        %567 = vmatpush1.bf16.msra.mxu0 %v548
        %568 = vmatprep.subr.bf16.mxu0 0
        %569 = vmatpush1.bf16.msra.mxu0 %v549
        %570 = vmatprep.subr.bf16.mxu0 0
        %571 = vmatpush1.bf16.msra.mxu0 %v550
        %572 = vmatprep.subr.bf16.mxu0 0
        %573 = vmatpush1.bf16.msra.mxu0 %v551
        %574 = vmatprep.subr.bf16.mxu0 0
        %575 = vmatpush1.bf16.msra.mxu0 %v552
        %576 = vmatprep.subr.bf16.mxu0 0
        %577 = vmatpush1.bf16.msra.mxu0 %v553
        %578 = vmatprep.subr.bf16.mxu0 0
        %579 = vmatpush1.bf16.msra.mxu0 0
        %580 = vmatprep.subr.bf16.mxu0 0
        %581 = vmatpush1.bf16.msra.mxu0 0
        %582 = vmatprep.subr.bf16.mxu0 0
        %583 = vmatpush1.bf16.msra.mxu0 0
        %584 = vmatprep.subr.bf16.mxu0 0
        %585 = vmatpush1.bf16.msra.mxu0 0
        %586 = vmatprep.subr.bf16.mxu0 0
        %587 = vmatpush1.bf16.msra.mxu0 0
        %588 = vmatprep.subr.bf16.mxu0 0
        %589 = vmatpush1.bf16.msra.mxu0 0
        %590 = vmatprep.subr.bf16.mxu0 0
        %591 = vmatpush1.bf16.msra.mxu0 0
        %592 = vmatprep.subr.bf16.mxu0 0
        %593 = vmatpush1.bf16.msra.mxu0 0
        %594 = vmatprep.mubr.bf16.mxu0 0
        %595 = vmatmul.mubr.bf16.gmra.mrb[0].mxu0 %v512
        %v596 = vpop.f32.mrb[0].mxu0
        %v597 = vadd.f32 %v506, %v596
        %v598 = vpop.f32.mrb[0].mxu0
        %v599 = vpop.f32.mrb[0].mxu0
        %v600 = vadd.f32 %v506, %v599
        %v601 = vpop.f32.mrb[0].mxu0
        %602 = vdwg.mxu0
        %v603 = vmul.f32 %v597, 0.01
        %v604 = vmul.f32 %v600, 0.01
        %v605 = vmax.f32 %v597, %v603
        %v606 = vmax.f32 %v600, %v604
        %v609 = vunpack.c.l.b16 %v483
        %v610 = vunpack.c.l.b16 %v484
        %v611 = vpack.c.b16 %v610, %v609
        %613 = vmatprep.subr.bf16.mxu0 0
        %614 = vmatpush1.bf16.msra.mxu0 %v546
        %615 = vmatprep.subr.bf16.mxu0 0
        %616 = vmatpush1.bf16.msra.mxu0 %v547
        %617 = vmatprep.subr.bf16.mxu0 0
        %618 = vmatpush1.bf16.msra.mxu0 %v548
        %619 = vmatprep.subr.bf16.mxu0 0
        %620 = vmatpush1.bf16.msra.mxu0 %v549
        %621 = vmatprep.subr.bf16.mxu0 0
        %622 = vmatpush1.bf16.msra.mxu0 %v550
        %623 = vmatprep.subr.bf16.mxu0 0
        %624 = vmatpush1.bf16.msra.mxu0 %v551
        %625 = vmatprep.subr.bf16.mxu0 0
        %626 = vmatpush1.bf16.msra.mxu0 %v552
        %627 = vmatprep.subr.bf16.mxu0 0
        %628 = vmatpush1.bf16.msra.mxu0 %v553
        %629 = vmatprep.subr.bf16.mxu0 0
        %630 = vmatpush1.bf16.msra.mxu0 0
        %631 = vmatprep.subr.bf16.mxu0 0
        %632 = vmatpush1.bf16.msra.mxu0 0
        %633 = vmatprep.subr.bf16.mxu0 0
        %634 = vmatpush1.bf16.msra.mxu0 0
        %635 = vmatprep.subr.bf16.mxu0 0
        %636 = vmatpush1.bf16.msra.mxu0 0
        %637 = vmatprep.subr.bf16.mxu0 0
        %638 = vmatpush1.bf16.msra.mxu0 0
        %639 = vmatprep.subr.bf16.mxu0 0
        %640 = vmatpush1.bf16.msra.mxu0 0
        %641 = vmatprep.subr.bf16.mxu0 0
        %642 = vmatpush1.bf16.msra.mxu0 0
        %643 = vmatprep.subr.bf16.mxu0 0
        %644 = vmatpush1.bf16.msra.mxu0 0
        %645 = vmatprep.mubr.bf16.mxu0 0
        %646 = vmatmul.mubr.bf16.gmra.mrb[0].mxu0 %v611
        %v647 = vpop.f32.mrb[0].mxu0
        %v648 = vadd.f32 %v506, %v647
        %v649 = vpop.f32.mrb[0].mxu0
        %v650 = vpop.f32.mrb[0].mxu0
        %v651 = vadd.f32 %v506, %v650
        %v652 = vpop.f32.mrb[0].mxu0
        %653 = vdwg.mxu0
        %v654 = vmul.f32 %v648, 0.01
        %v655 = vmul.f32 %v651, 0.01
        %v656 = vmax.f32 %v648, %v654
        %v657 = vmax.f32 %v651, %v655
        %v658 = vpack.c.bf16 %v606, %v605
        %v659 = vpack.c.bf16 %v657, %v656
        %v660 = vld [vmem:[#allocation7] sm:$0xf]
        %v661 = vld [vmem:[#allocation7 + $0x4] sm:$0xf]
        %v662 = vld [vmem:[#allocation7 + $0x8] sm:$0xf]
        %v663 = vld [vmem:[#allocation7 + $0xc] sm:$0xf]
        %v664 = vld [vmem:[#allocation7 + $0x10] sm:$0xf]
        %v665 = vld [vmem:[#allocation7 + $0x14] sm:$0xf]
        %v666 = vld [vmem:[#allocation7 + $0x18] sm:$0xf]
        %v667 = vld [vmem:[#allocation7 + $0x1c] sm:$0xf]
        %v668 = vld [vmem:[#allocation7 + $0x20] sm:$0xf]
        %v669 = vld [vmem:[#allocation7 + $0x24] sm:$0xf]
        %v670 = vld [vmem:[#allocation7 + $0x28] sm:$0xf]
        %v671 = vld [vmem:[#allocation7 + $0x2c] sm:$0xf]
        %v672 = vld [vmem:[#allocation7 + $0x30] sm:$0xf]
        %v673 = vld [vmem:[#allocation7 + $0x34] sm:$0xf]
        %v674 = vld [vmem:[#allocation7 + $0x38] sm:$0xf]
        %v675 = vld [vmem:[#allocation7 + $0x3c] sm:$0xf]
        %v676 = vld [vmem:[%s4] sm:$0x1]
        %v678 = vlaneseq
        %v679 = vshrl.u32 %v678, 7
        %v680 = vsub.s32 0, %v679
        %v681 = vrot.slane %v676, %v680
        %v699 = vunpack.c.l.b16 %v660
        %v700 = vunpack.c.l.b16 %v661
        %v701 = vunpack.c.l.b16 %v662
        %v702 = vunpack.c.l.b16 %v663
        %v703 = vunpack.c.l.b16 %v664
        %v704 = vunpack.c.l.b16 %v665
        %v705 = vunpack.c.l.b16 %v666
        %v706 = vunpack.c.l.b16 %v667
        %v707 = vunpack.c.l.b16 %v668
        %v708 = vunpack.c.l.b16 %v669
        %v709 = vunpack.c.l.b16 %v670
        %v710 = vunpack.c.l.b16 %v671
        %v711 = vunpack.c.l.b16 %v672
        %v712 = vunpack.c.l.b16 %v673
        %v713 = vunpack.c.l.b16 %v674
        %v714 = vunpack.c.l.b16 %v675
        %v715 = vpack.c.b16 %v700, %v699
        %v716 = vpack.c.b16 %v702, %v701
        %v717 = vpack.c.b16 %v704, %v703
        %v718 = vpack.c.b16 %v706, %v705
        %v719 = vpack.c.b16 %v708, %v707
        %v720 = vpack.c.b16 %v710, %v709
        %v721 = vpack.c.b16 %v712, %v711
        %v722 = vpack.c.b16 %v714, %v713
        %731 = vmatprep.subr.bf16.mxu0 0
        %732 = vmatpush1.bf16.msra.mxu0 %v715
        %733 = vmatprep.subr.bf16.mxu0 0
        %734 = vmatpush1.bf16.msra.mxu0 %v716
        %735 = vmatprep.subr.bf16.mxu0 0
        %736 = vmatpush1.bf16.msra.mxu0 %v717
        %737 = vmatprep.subr.bf16.mxu0 0
        %738 = vmatpush1.bf16.msra.mxu0 %v718
        %739 = vmatprep.subr.bf16.mxu0 0
        %740 = vmatpush1.bf16.msra.mxu0 %v719
        %741 = vmatprep.subr.bf16.mxu0 0
        %742 = vmatpush1.bf16.msra.mxu0 %v720
        %743 = vmatprep.subr.bf16.mxu0 0
        %744 = vmatpush1.bf16.msra.mxu0 %v721
        %745 = vmatprep.subr.bf16.mxu0 0
        %746 = vmatpush1.bf16.msra.mxu0 %v722
        %747 = vmatprep.subr.bf16.mxu0 0
        %748 = vmatpush1.bf16.msra.mxu0 0
        %749 = vmatprep.subr.bf16.mxu0 0
        %750 = vmatpush1.bf16.msra.mxu0 0
        %751 = vmatprep.subr.bf16.mxu0 0
        %752 = vmatpush1.bf16.msra.mxu0 0
        %753 = vmatprep.subr.bf16.mxu0 0
        %754 = vmatpush1.bf16.msra.mxu0 0
        %755 = vmatprep.subr.bf16.mxu0 0
        %756 = vmatpush1.bf16.msra.mxu0 0
        %757 = vmatprep.subr.bf16.mxu0 0
        %758 = vmatpush1.bf16.msra.mxu0 0
        %759 = vmatprep.subr.bf16.mxu0 0
        %760 = vmatpush1.bf16.msra.mxu0 0
        %761 = vmatprep.subr.bf16.mxu0 0
        %762 = vmatpush1.bf16.msra.mxu0 0
        %763 = vmatprep.mubr.bf16.mxu0 0
        %764 = vmatmul.mubr.bf16.gmra.mrb[0].mxu0 %v658
        %v765 = vpop.f32.mrb[0].mxu0
        %v766 = vadd.f32 %v681, %v765
        %v767 = vpop.f32.mrb[0].mxu0
        %v768 = vpop.f32.mrb[0].mxu0
        %v769 = vadd.f32 %v681, %v768
        %v770 = vpop.f32.mrb[0].mxu0
        %771 = vdwg.mxu0
        %v772 = vmul.f32 %v766, 0.01
        %v773 = vmul.f32 %v769, 0.01
        %v774 = vmax.f32 %v766, %v772
        %v775 = vmax.f32 %v769, %v773
        %776 = vmatprep.subr.bf16.mxu0 0
        %777 = vmatpush1.bf16.msra.mxu0 %v715
        %778 = vmatprep.subr.bf16.mxu0 0
        %779 = vmatpush1.bf16.msra.mxu0 %v716
        %780 = vmatprep.subr.bf16.mxu0 0
        %781 = vmatpush1.bf16.msra.mxu0 %v717
        %782 = vmatprep.subr.bf16.mxu0 0
        %783 = vmatpush1.bf16.msra.mxu0 %v718
        %784 = vmatprep.subr.bf16.mxu0 0
        %785 = vmatpush1.bf16.msra.mxu0 %v719
        %786 = vmatprep.subr.bf16.mxu0 0
        %787 = vmatpush1.bf16.msra.mxu0 %v720
        %788 = vmatprep.subr.bf16.mxu0 0
        %789 = vmatpush1.bf16.msra.mxu0 %v721
        %790 = vmatprep.subr.bf16.mxu0 0
        %791 = vmatpush1.bf16.msra.mxu0 %v722
        %792 = vmatprep.subr.bf16.mxu0 0
        %793 = vmatpush1.bf16.msra.mxu0 0
        %794 = vmatprep.subr.bf16.mxu0 0
        %795 = vmatpush1.bf16.msra.mxu0 0
        %796 = vmatprep.subr.bf16.mxu0 0
        %797 = vmatpush1.bf16.msra.mxu0 0
        %798 = vmatprep.subr.bf16.mxu0 0
        %799 = vmatpush1.bf16.msra.mxu0 0
        %800 = vmatprep.subr.bf16.mxu0 0
        %801 = vmatpush1.bf16.msra.mxu0 0
        %802 = vmatprep.subr.bf16.mxu0 0
        %803 = vmatpush1.bf16.msra.mxu0 0
        %804 = vmatprep.subr.bf16.mxu0 0
        %805 = vmatpush1.bf16.msra.mxu0 0
        %806 = vmatprep.subr.bf16.mxu0 0
        %807 = vmatpush1.bf16.msra.mxu0 0
        %808 = vmatprep.mubr.bf16.mxu0 0
        %809 = vmatmul.mubr.bf16.gmra.mrb[0].mxu0 %v659
        %v810 = vpop.f32.mrb[0].mxu0
        %v811 = vadd.f32 %v681, %v810
        %v812 = vpop.f32.mrb[0].mxu0
        %v813 = vpop.f32.mrb[0].mxu0
        %v814 = vadd.f32 %v681, %v813
        %v815 = vpop.f32.mrb[0].mxu0
        %816 = vdwg.mxu0
        %v817 = vmul.f32 %v811, 0.01
        %v818 = vmul.f32 %v814, 0.01
        %v819 = vmax.f32 %v811, %v817
        %v820 = vmax.f32 %v814, %v818
        %v821 = vpack.c.bf16 %v775, %v774
        %v822 = vpack.c.bf16 %v820, %v819
        %v823 = vld [vmem:[#allocation8] sm:$0xf]
        %v824 = vld [vmem:[#allocation8 + $0x4] sm:$0xf]
        %v825 = vld [vmem:[#allocation8 + $0x8] sm:$0xf]
        %v826 = vld [vmem:[#allocation8 + $0xc] sm:$0xf]
        %v827 = vld [vmem:[#allocation8 + $0x10] sm:$0xf]
        %v828 = vld [vmem:[#allocation8 + $0x14] sm:$0xf]
        %v829 = vld [vmem:[#allocation8 + $0x18] sm:$0xf]
        %v830 = vld [vmem:[#allocation8 + $0x1c] sm:$0xf]
        %v831 = vld [vmem:[#allocation8 + $0x20] sm:$0xf]
        %v832 = vld [vmem:[#allocation8 + $0x24] sm:$0xf]
        %v833 = vld [vmem:[#allocation8 + $0x28] sm:$0xf]
        %v834 = vld [vmem:[#allocation8 + $0x2c] sm:$0xf]
        %v835 = vld [vmem:[#allocation8 + $0x30] sm:$0xf]
        %v836 = vld [vmem:[#allocation8 + $0x34] sm:$0xf]
        %v837 = vld [vmem:[#allocation8 + $0x38] sm:$0xf]
        %v838 = vld [vmem:[#allocation8 + $0x3c] sm:$0xf]
        %v839 = vld [vmem:[%s6] sm:$0x1]
        %v841 = vlaneseq
        %v842 = vshrl.u32 %v841, 7
        %v843 = vsub.s32 0, %v842
        %v844 = vrot.slane %v839, %v843
        %v862 = vunpack.c.l.b16 %v823
        %v863 = vunpack.c.l.b16 %v824
        %v864 = vunpack.c.l.b16 %v825
        %v865 = vunpack.c.l.b16 %v826
        %v866 = vunpack.c.l.b16 %v827
        %v867 = vunpack.c.l.b16 %v828
        %v868 = vunpack.c.l.b16 %v829
        %v869 = vunpack.c.l.b16 %v830
        %v870 = vunpack.c.l.b16 %v831
        %v871 = vunpack.c.l.b16 %v832
        %v872 = vunpack.c.l.b16 %v833
        %v873 = vunpack.c.l.b16 %v834
        %v874 = vunpack.c.l.b16 %v835
        %v875 = vunpack.c.l.b16 %v836
        %v876 = vunpack.c.l.b16 %v837
        %v877 = vunpack.c.l.b16 %v838
        %v878 = vpack.c.b16 %v863, %v862
        %v879 = vpack.c.b16 %v865, %v864
        %v880 = vpack.c.b16 %v867, %v866
        %v881 = vpack.c.b16 %v869, %v868
        %v882 = vpack.c.b16 %v871, %v870
        %v883 = vpack.c.b16 %v873, %v872
        %v884 = vpack.c.b16 %v875, %v874
        %v885 = vpack.c.b16 %v877, %v876
        %894 = vmatprep.subr.bf16.mxu0 0
        %895 = vmatpush1.bf16.msra.mxu0 %v878
        %896 = vmatprep.subr.bf16.mxu0 0
        %897 = vmatpush1.bf16.msra.mxu0 %v879
        %898 = vmatprep.subr.bf16.mxu0 0
        %899 = vmatpush1.bf16.msra.mxu0 %v880
        %900 = vmatprep.subr.bf16.mxu0 0
        %901 = vmatpush1.bf16.msra.mxu0 %v881
        %902 = vmatprep.subr.bf16.mxu0 0
        %903 = vmatpush1.bf16.msra.mxu0 %v882
        %904 = vmatprep.subr.bf16.mxu0 0
        %905 = vmatpush1.bf16.msra.mxu0 %v883
        %906 = vmatprep.subr.bf16.mxu0 0
        %907 = vmatpush1.bf16.msra.mxu0 %v884
        %908 = vmatprep.subr.bf16.mxu0 0
        %909 = vmatpush1.bf16.msra.mxu0 %v885
        %910 = vmatprep.subr.bf16.mxu0 0
        %911 = vmatpush1.bf16.msra.mxu0 0
        %912 = vmatprep.subr.bf16.mxu0 0
        %913 = vmatpush1.bf16.msra.mxu0 0
        %914 = vmatprep.subr.bf16.mxu0 0
        %915 = vmatpush1.bf16.msra.mxu0 0
        %916 = vmatprep.subr.bf16.mxu0 0
        %917 = vmatpush1.bf16.msra.mxu0 0
        %918 = vmatprep.subr.bf16.mxu0 0
        %919 = vmatpush1.bf16.msra.mxu0 0
        %920 = vmatprep.subr.bf16.mxu0 0
        %921 = vmatpush1.bf16.msra.mxu0 0
        %922 = vmatprep.subr.bf16.mxu0 0
        %923 = vmatpush1.bf16.msra.mxu0 0
        %924 = vmatprep.subr.bf16.mxu0 0
        %925 = vmatpush1.bf16.msra.mxu0 0
        %926 = vmatprep.mubr.bf16.mxu0 0
        %927 = vmatmul.mubr.bf16.gmra.mrb[0].mxu0 %v821
        %v928 = vpop.f32.mrb[0].mxu0
        %v929 = vadd.f32 %v844, %v928
        %v930 = vpop.f32.mrb[0].mxu0
        %v931 = vpop.f32.mrb[0].mxu0
        %v932 = vadd.f32 %v844, %v931
        %v933 = vpop.f32.mrb[0].mxu0
        %934 = vdwg.mxu0
        %v935 = vmul.f32 %v929, 0.01
        %v936 = vmul.f32 %v932, 0.01
        %v937 = vmax.f32 %v929, %v935
        %v938 = vmax.f32 %v932, %v936
        %939 = vmatprep.subr.bf16.mxu0 0
        %940 = vmatpush1.bf16.msra.mxu0 %v878
        %941 = vmatprep.subr.bf16.mxu0 0
        %942 = vmatpush1.bf16.msra.mxu0 %v879
        %943 = vmatprep.subr.bf16.mxu0 0
        %944 = vmatpush1.bf16.msra.mxu0 %v880
        %945 = vmatprep.subr.bf16.mxu0 0
        %946 = vmatpush1.bf16.msra.mxu0 %v881
        %947 = vmatprep.subr.bf16.mxu0 0
        %948 = vmatpush1.bf16.msra.mxu0 %v882
        %949 = vmatprep.subr.bf16.mxu0 0
        %950 = vmatpush1.bf16.msra.mxu0 %v883
        %951 = vmatprep.subr.bf16.mxu0 0
        %952 = vmatpush1.bf16.msra.mxu0 %v884
        %953 = vmatprep.subr.bf16.mxu0 0
        %954 = vmatpush1.bf16.msra.mxu0 %v885
        %955 = vmatprep.subr.bf16.mxu0 0
        %956 = vmatpush1.bf16.msra.mxu0 0
        %957 = vmatprep.subr.bf16.mxu0 0
        %958 = vmatpush1.bf16.msra.mxu0 0
        %959 = vmatprep.subr.bf16.mxu0 0
        %960 = vmatpush1.bf16.msra.mxu0 0
        %961 = vmatprep.subr.bf16.mxu0 0
        %962 = vmatpush1.bf16.msra.mxu0 0
        %963 = vmatprep.subr.bf16.mxu0 0
        %964 = vmatpush1.bf16.msra.mxu0 0
        %965 = vmatprep.subr.bf16.mxu0 0
        %966 = vmatpush1.bf16.msra.mxu0 0
        %967 = vmatprep.subr.bf16.mxu0 0
        %968 = vmatpush1.bf16.msra.mxu0 0
        %969 = vmatprep.subr.bf16.mxu0 0
        %970 = vmatpush1.bf16.msra.mxu0 0
        %971 = vmatprep.mubr.bf16.mxu0 0
        %972 = vmatmul.mubr.bf16.gmra.mrb[0].mxu0 %v822
        %v973 = vpop.f32.mrb[0].mxu0
        %v974 = vadd.f32 %v844, %v973
        %v975 = vpop.f32.mrb[0].mxu0
        %v976 = vpop.f32.mrb[0].mxu0
        %v977 = vadd.f32 %v844, %v976
        %v978 = vpop.f32.mrb[0].mxu0
        %979 = vdwg.mxu0
        %v980 = vmul.f32 %v974, 0.01
        %v981 = vmul.f32 %v977, 0.01
        %v982 = vmax.f32 %v974, %v980
        %v983 = vmax.f32 %v977, %v981
        %v984 = vpack.c.bf16 %v938, %v937
        %v985 = vpack.c.bf16 %v983, %v982
        %v986 = vld [vmem:[#allocation10] sm:$0xf]
        %v987 = vld [vmem:[#allocation10 + $0x4] sm:$0xf]
        %v988 = vld [vmem:[#allocation10 + $0x8] sm:$0xf]
        %v989 = vld [vmem:[#allocation10 + $0xc] sm:$0xf]
        %v990 = vld [vmem:[#allocation10 + $0x10] sm:$0xf]
        %v991 = vld [vmem:[#allocation10 + $0x14] sm:$0xf]
        %v992 = vld [vmem:[#allocation10 + $0x18] sm:$0xf]
        %v993 = vld [vmem:[#allocation10 + $0x1c] sm:$0xf]
        %v994 = vld [vmem:[#allocation10 + $0x20] sm:$0xf]
        %v995 = vld [vmem:[#allocation10 + $0x24] sm:$0xf]
        %v996 = vld [vmem:[#allocation10 + $0x28] sm:$0xf]
        %v997 = vld [vmem:[#allocation10 + $0x2c] sm:$0xf]
        %v998 = vld [vmem:[#allocation10 + $0x30] sm:$0xf]
        %v999 = vld [vmem:[#allocation10 + $0x34] sm:$0xf]
        %v1000 = vld [vmem:[#allocation10 + $0x38] sm:$0xf]
        %v1001 = vld [vmem:[#allocation10 + $0x3c] sm:$0xf]
        %v1002 = vld [vmem:[%s8] sm:$0x1]
        %v1004 = vlaneseq
        %v1005 = vshrl.u32 %v1004, 7
        %v1006 = vsub.s32 0, %v1005
        %v1007 = vrot.slane %v1002, %v1006
        %v1025 = vunpack.c.l.b16 %v986
        %v1026 = vunpack.c.l.b16 %v987
        %v1027 = vunpack.c.l.b16 %v988
        %v1028 = vunpack.c.l.b16 %v989
        %v1029 = vunpack.c.l.b16 %v990
        %v1030 = vunpack.c.l.b16 %v991
        %v1031 = vunpack.c.l.b16 %v992
        %v1032 = vunpack.c.l.b16 %v993
        %v1033 = vunpack.c.l.b16 %v994
        %v1034 = vunpack.c.l.b16 %v995
        %v1035 = vunpack.c.l.b16 %v996
        %v1036 = vunpack.c.l.b16 %v997
        %v1037 = vunpack.c.l.b16 %v998
        %v1038 = vunpack.c.l.b16 %v999
        %v1039 = vunpack.c.l.b16 %v1000
        %v1040 = vunpack.c.l.b16 %v1001
        %v1041 = vpack.c.b16 %v1026, %v1025
        %v1042 = vpack.c.b16 %v1028, %v1027
        %v1043 = vpack.c.b16 %v1030, %v1029
        %v1044 = vpack.c.b16 %v1032, %v1031
        %v1045 = vpack.c.b16 %v1034, %v1033
        %v1046 = vpack.c.b16 %v1036, %v1035
        %v1047 = vpack.c.b16 %v1038, %v1037
        %v1048 = vpack.c.b16 %v1040, %v1039
        %1057 = vmatprep.subr.bf16.mxu0 0
        %1058 = vmatpush1.bf16.msra.mxu0 %v1041
        %1059 = vmatprep.subr.bf16.mxu0 0
        %1060 = vmatpush1.bf16.msra.mxu0 %v1042
        %1061 = vmatprep.subr.bf16.mxu0 0
        %1062 = vmatpush1.bf16.msra.mxu0 %v1043
        %1063 = vmatprep.subr.bf16.mxu0 0
        %1064 = vmatpush1.bf16.msra.mxu0 %v1044
        %1065 = vmatprep.subr.bf16.mxu0 0
        %1066 = vmatpush1.bf16.msra.mxu0 %v1045
        %1067 = vmatprep.subr.bf16.mxu0 0
        %1068 = vmatpush1.bf16.msra.mxu0 %v1046
        %1069 = vmatprep.subr.bf16.mxu0 0
        %1070 = vmatpush1.bf16.msra.mxu0 %v1047
        %1071 = vmatprep.subr.bf16.mxu0 0
        %1072 = vmatpush1.bf16.msra.mxu0 %v1048
        %1073 = vmatprep.subr.bf16.mxu0 0
        %1074 = vmatpush1.bf16.msra.mxu0 0
        %1075 = vmatprep.subr.bf16.mxu0 0
        %1076 = vmatpush1.bf16.msra.mxu0 0
        %1077 = vmatprep.subr.bf16.mxu0 0
        %1078 = vmatpush1.bf16.msra.mxu0 0
        %1079 = vmatprep.subr.bf16.mxu0 0
        %1080 = vmatpush1.bf16.msra.mxu0 0
        %1081 = vmatprep.subr.bf16.mxu0 0
        %1082 = vmatpush1.bf16.msra.mxu0 0
        %1083 = vmatprep.subr.bf16.mxu0 0
        %1084 = vmatpush1.bf16.msra.mxu0 0
        %1085 = vmatprep.subr.bf16.mxu0 0
        %1086 = vmatpush1.bf16.msra.mxu0 0
        %1087 = vmatprep.subr.bf16.mxu0 0
        %1088 = vmatpush1.bf16.msra.mxu0 0
        %1089 = vmatprep.mubr.bf16.mxu0 0
        %1090 = vmatmul.mubr.bf16.gmra.mrb[0].mxu0 %v984
        %v1091 = vpop.f32.mrb[0].mxu0
        %v1092 = vadd.f32 %v1007, %v1091
        %v1093 = vpop.f32.mrb[0].mxu0
        %v1094 = vpop.f32.mrb[0].mxu0
        %v1095 = vadd.f32 %v1007, %v1094
        %v1096 = vpop.f32.mrb[0].mxu0
        %1097 = vdwg.mxu0
        %v1098 = vmul.f32 %v1092, 0.01
        %v1099 = vmul.f32 %v1095, 0.01
        %v1100 = vmax.f32 %v1092, %v1098
        %v1101 = vmax.f32 %v1095, %v1099
        %1102 = vmatprep.subr.bf16.mxu0 0
        %1103 = vmatpush1.bf16.msra.mxu0 %v1041
        %1104 = vmatprep.subr.bf16.mxu0 0
        %1105 = vmatpush1.bf16.msra.mxu0 %v1042
        %1106 = vmatprep.subr.bf16.mxu0 0
        %1107 = vmatpush1.bf16.msra.mxu0 %v1043
        %1108 = vmatprep.subr.bf16.mxu0 0
        %1109 = vmatpush1.bf16.msra.mxu0 %v1044
        %1110 = vmatprep.subr.bf16.mxu0 0
        %1111 = vmatpush1.bf16.msra.mxu0 %v1045
        %1112 = vmatprep.subr.bf16.mxu0 0
        %1113 = vmatpush1.bf16.msra.mxu0 %v1046
        %1114 = vmatprep.subr.bf16.mxu0 0
        %1115 = vmatpush1.bf16.msra.mxu0 %v1047
        %1116 = vmatprep.subr.bf16.mxu0 0
        %1117 = vmatpush1.bf16.msra.mxu0 %v1048
        %1118 = vmatprep.subr.bf16.mxu0 0
        %1119 = vmatpush1.bf16.msra.mxu0 0
        %1120 = vmatprep.subr.bf16.mxu0 0
        %1121 = vmatpush1.bf16.msra.mxu0 0
        %1122 = vmatprep.subr.bf16.mxu0 0
        %1123 = vmatpush1.bf16.msra.mxu0 0
        %1124 = vmatprep.subr.bf16.mxu0 0
        %1125 = vmatpush1.bf16.msra.mxu0 0
        %1126 = vmatprep.subr.bf16.mxu0 0
        %1127 = vmatpush1.bf16.msra.mxu0 0
        %1128 = vmatprep.subr.bf16.mxu0 0
        %1129 = vmatpush1.bf16.msra.mxu0 0
        %1130 = vmatprep.subr.bf16.mxu0 0
        %1131 = vmatpush1.bf16.msra.mxu0 0
        %1132 = vmatprep.subr.bf16.mxu0 0
        %1133 = vmatpush1.bf16.msra.mxu0 0
        %1134 = vmatprep.mubr.bf16.mxu0 0
        %1135 = vmatmul.mubr.bf16.gmra.mrb[0].mxu0 %v985
        %v1136 = vpop.f32.mrb[0].mxu0
        %v1137 = vadd.f32 %v1007, %v1136
        %v1138 = vpop.f32.mrb[0].mxu0
        %v1139 = vpop.f32.mrb[0].mxu0
        %v1140 = vadd.f32 %v1007, %v1139
        %v1141 = vpop.f32.mrb[0].mxu0
        %1142 = vdwg.mxu0
        %v1143 = vmul.f32 %v1137, 0.01
        %v1144 = vmul.f32 %v1140, 0.01
        %v1145 = vmax.f32 %v1137, %v1143
        %v1146 = vmax.f32 %v1140, %v1144
        %v1147 = vpack.c.bf16 %v1101, %v1100
        %v1148 = vpack.c.bf16 %v1146, %v1145
        %v1149 = vld [vmem:[#allocation11] sm:$0xf]
        %v1150 = vld [vmem:[#allocation11 + $0x4] sm:$0xf]
        %v1151 = vld [vmem:[#allocation11 + $0x8] sm:$0xf]
        %v1152 = vld [vmem:[#allocation11 + $0xc] sm:$0xf]
        %v1153 = vld [vmem:[#allocation11 + $0x10] sm:$0xf]
        %v1154 = vld [vmem:[#allocation11 + $0x14] sm:$0xf]
        %v1155 = vld [vmem:[#allocation11 + $0x18] sm:$0xf]
        %v1156 = vld [vmem:[#allocation11 + $0x1c] sm:$0xf]
        %v1157 = vld [vmem:[#allocation11 + $0x20] sm:$0xf]
        %v1158 = vld [vmem:[#allocation11 + $0x24] sm:$0xf]
        %v1159 = vld [vmem:[#allocation11 + $0x28] sm:$0xf]
        %v1160 = vld [vmem:[#allocation11 + $0x2c] sm:$0xf]
        %v1161 = vld [vmem:[#allocation11 + $0x30] sm:$0xf]
        %v1162 = vld [vmem:[#allocation11 + $0x34] sm:$0xf]
        %v1163 = vld [vmem:[#allocation11 + $0x38] sm:$0xf]
        %v1164 = vld [vmem:[#allocation11 + $0x3c] sm:$0xf]
        %v1165 = vld [vmem:[%s10] sm:$0x1]
        %v1167 = vlaneseq
        %v1168 = vshrl.u32 %v1167, 7
        %v1169 = vsub.s32 0, %v1168
        %v1170 = vrot.slane %v1165, %v1169
        %v1188 = vunpack.c.l.b16 %v1149
        %v1189 = vunpack.c.l.b16 %v1150
        %v1190 = vunpack.c.l.b16 %v1151
        %v1191 = vunpack.c.l.b16 %v1152
        %v1192 = vunpack.c.l.b16 %v1153
        %v1193 = vunpack.c.l.b16 %v1154
        %v1194 = vunpack.c.l.b16 %v1155
        %v1195 = vunpack.c.l.b16 %v1156
        %v1196 = vunpack.c.l.b16 %v1157
        %v1197 = vunpack.c.l.b16 %v1158
        %v1198 = vunpack.c.l.b16 %v1159
        %v1199 = vunpack.c.l.b16 %v1160
        %v1200 = vunpack.c.l.b16 %v1161
        %v1201 = vunpack.c.l.b16 %v1162
        %v1202 = vunpack.c.l.b16 %v1163
        %v1203 = vunpack.c.l.b16 %v1164
        %v1204 = vpack.c.b16 %v1189, %v1188
        %v1205 = vpack.c.b16 %v1191, %v1190
        %v1206 = vpack.c.b16 %v1193, %v1192
        %v1207 = vpack.c.b16 %v1195, %v1194
        %v1208 = vpack.c.b16 %v1197, %v1196
        %v1209 = vpack.c.b16 %v1199, %v1198
        %v1210 = vpack.c.b16 %v1201, %v1200
        %v1211 = vpack.c.b16 %v1203, %v1202
        %1220 = vmatprep.subr.bf16.mxu0 0
        %1221 = vmatpush1.bf16.msra.mxu0 %v1204
        %1222 = vmatprep.subr.bf16.mxu0 0
        %1223 = vmatpush1.bf16.msra.mxu0 %v1205
        %1224 = vmatprep.subr.bf16.mxu0 0
        %1225 = vmatpush1.bf16.msra.mxu0 %v1206
        %1226 = vmatprep.subr.bf16.mxu0 0
        %1227 = vmatpush1.bf16.msra.mxu0 %v1207
        %1228 = vmatprep.subr.bf16.mxu0 0
        %1229 = vmatpush1.bf16.msra.mxu0 %v1208
        %1230 = vmatprep.subr.bf16.mxu0 0
        %1231 = vmatpush1.bf16.msra.mxu0 %v1209
        %1232 = vmatprep.subr.bf16.mxu0 0
        %1233 = vmatpush1.bf16.msra.mxu0 %v1210
        %1234 = vmatprep.subr.bf16.mxu0 0
        %1235 = vmatpush1.bf16.msra.mxu0 %v1211
        %1236 = vmatprep.subr.bf16.mxu0 0
        %1237 = vmatpush1.bf16.msra.mxu0 0
        %1238 = vmatprep.subr.bf16.mxu0 0
        %1239 = vmatpush1.bf16.msra.mxu0 0
        %1240 = vmatprep.subr.bf16.mxu0 0
        %1241 = vmatpush1.bf16.msra.mxu0 0
        %1242 = vmatprep.subr.bf16.mxu0 0
        %1243 = vmatpush1.bf16.msra.mxu0 0
        %1244 = vmatprep.subr.bf16.mxu0 0
        %1245 = vmatpush1.bf16.msra.mxu0 0
        %1246 = vmatprep.subr.bf16.mxu0 0
        %1247 = vmatpush1.bf16.msra.mxu0 0
        %1248 = vmatprep.subr.bf16.mxu0 0
        %1249 = vmatpush1.bf16.msra.mxu0 0
        %1250 = vmatprep.subr.bf16.mxu0 0
        %1251 = vmatpush1.bf16.msra.mxu0 0
        %1252 = vmatprep.mubr.bf16.mxu0 0
        %1253 = vmatmul.mubr.bf16.gmra.mrb[0].mxu0 %v1147
        %v1254 = vpop.f32.mrb[0].mxu0
        %v1255 = vadd.f32 %v1170, %v1254
        %v1256 = vpop.f32.mrb[0].mxu0
        %v1257 = vpop.f32.mrb[0].mxu0
        %v1258 = vadd.f32 %v1170, %v1257
        %v1259 = vpop.f32.mrb[0].mxu0
        %1260 = vdwg.mxu0
        %v1261 = vmul.f32 %v1255, 0.01
        %v1262 = vmul.f32 %v1258, 0.01
        %v1263 = vmax.f32 %v1255, %v1261
        %v1264 = vmax.f32 %v1258, %v1262
        %1265 = vmatprep.subr.bf16.mxu0 0
        %1266 = vmatpush1.bf16.msra.mxu0 %v1204
        %1267 = vmatprep.subr.bf16.mxu0 0
        %1268 = vmatpush1.bf16.msra.mxu0 %v1205
        %1269 = vmatprep.subr.bf16.mxu0 0
        %1270 = vmatpush1.bf16.msra.mxu0 %v1206
        %1271 = vmatprep.subr.bf16.mxu0 0
        %1272 = vmatpush1.bf16.msra.mxu0 %v1207
        %1273 = vmatprep.subr.bf16.mxu0 0
        %1274 = vmatpush1.bf16.msra.mxu0 %v1208
        %1275 = vmatprep.subr.bf16.mxu0 0
        %1276 = vmatpush1.bf16.msra.mxu0 %v1209
        %1277 = vmatprep.subr.bf16.mxu0 0
        %1278 = vmatpush1.bf16.msra.mxu0 %v1210
        %1279 = vmatprep.subr.bf16.mxu0 0
        %1280 = vmatpush1.bf16.msra.mxu0 %v1211
        %1281 = vmatprep.subr.bf16.mxu0 0
        %1282 = vmatpush1.bf16.msra.mxu0 0
        %1283 = vmatprep.subr.bf16.mxu0 0
        %1284 = vmatpush1.bf16.msra.mxu0 0
        %1285 = vmatprep.subr.bf16.mxu0 0
        %1286 = vmatpush1.bf16.msra.mxu0 0
        %1287 = vmatprep.subr.bf16.mxu0 0
        %1288 = vmatpush1.bf16.msra.mxu0 0
        %1289 = vmatprep.subr.bf16.mxu0 0
        %1290 = vmatpush1.bf16.msra.mxu0 0
        %1291 = vmatprep.subr.bf16.mxu0 0
        %1292 = vmatpush1.bf16.msra.mxu0 0
        %1293 = vmatprep.subr.bf16.mxu0 0
        %1294 = vmatpush1.bf16.msra.mxu0 0
        %1295 = vmatprep.subr.bf16.mxu0 0
        %1296 = vmatpush1.bf16.msra.mxu0 0
        %1297 = vmatprep.mubr.bf16.mxu0 0
        %1298 = vmatmul.mubr.bf16.gmra.mrb[0].mxu0 %v1148
        %v1299 = vpop.f32.mrb[0].mxu0
        %v1300 = vadd.f32 %v1170, %v1299
        %v1301 = vpop.f32.mrb[0].mxu0
        %v1302 = vpop.f32.mrb[0].mxu0
        %v1303 = vadd.f32 %v1170, %v1302
        %v1304 = vpop.f32.mrb[0].mxu0
        %1305 = vdwg.mxu0
        %v1306 = vmul.f32 %v1300, 0.01
        %v1307 = vmul.f32 %v1303, 0.01
        %v1308 = vmax.f32 %v1300, %v1306
        %v1309 = vmax.f32 %v1303, %v1307
        %v1310 = vpack.c.bf16 %v1264, %v1263
        %v1312 = vunpack.c.l.b16 %v1310
        %v1313 = vunpack.c.h.b16 %v1310
        %v1314 = vpack.c.b16 %v1312, %v1312
        %v1315 = vpack.c.b16 %v1313, %v1313
        %1318 = vst [vmem:[%s477] sm:$0xf] %v1314
        %1319 = vst [vmem:[%s477 + $0x4] sm:$0xf] %v1315
        %v1320 = vpack.c.bf16 %v1309, %v1308
        %v1322 = vunpack.c.l.b16 %v1320
        %v1323 = vunpack.c.h.b16 %v1320
        %v1324 = vpack.c.b16 %v1322, %v1322
        %v1325 = vpack.c.b16 %v1323, %v1323
        %1328 = vst [vmem:[%s477 + $0x8] sm:$0xf] %v1324
        %1329 = vst [vmem:[%s477 + $0xc] sm:$0xf] %v1325
        %s1330 = sand.u32 %s275, 1
        %s1331 = scalar_lea.sflag [#allocation4], %s1330
        %s1332 = sand.u32 %s275, 1
        %s1333 = smul.addr %s1332, 16
        %s1334 = scalar_lea.vmem [#allocation13], %s1333
        // Predicated region
        $region89: #{tpu_custom_call.1} parent=63 // pred_check
          %p1335 = pneg %p285
        $region90: #{tpu_custom_call.1} parent=63 // pred_check_branch
          %1337 = sbr.rel (%p1335) target = $region92
        $region91: #{tpu_custom_call.1} parent=63 // pred_region
          %s1338 = smul.u32 4, %s31
          %s1340 = ssub.s32 256, 256
          %1341 = vsyncadd %s1331, %s1340
          %s1342 = smul.addr %s1338, 64
          %s1343 = scalar_lea.hbm %s11, %s1342
          %s1344 = sshll.u32 %s1334, 4
          %s1345 = int_to_ptr.vmem [resolvable:$true] %s1344
          %1350 = dma.vmem_to_hbm [thread:$0]  %s1345, 256, %s1343, %s1331, 64, 64, 4
        $region92: #{tpu_custom_call.1} parent=63 // pred_fallthru
          _
      $region64: #{tpu_custom_call.1} parent=5 // pred_fallthru
        _
      %p1351 = scmp.le.s32.totalorder 2, %s26
      // Predicated region
      $region93: #{tpu_custom_call.1} parent=5 // pred_check
        %p1352 = pneg %p1351
      $region94: #{tpu_custom_call.1} parent=5 // pred_check_branch
        %1354 = sbr.rel (%p1352) target = $region96
      $region95: #{tpu_custom_call.1} parent=5 // pred_region
        %s1355 = ssub.s32 %s26, 2
        // Predicated region
        $region97: #{tpu_custom_call.1} parent=95 // pred_check
          %p1356 = pneg %p291
        $region98: #{tpu_custom_call.1} parent=95 // pred_check_branch
          %1358 = sbr.rel (%p1356) target = $region100
        $region99: #{tpu_custom_call.1} parent=95 // pred_region
          %s1359 = sand.u32 %s276, 1
          %s1360 = scalar_lea.sflag [#allocation4], %s1359
          %s1361 = sand.u32 %s276, 1
          %s1362 = smul.addr %s1361, 16
          %s1363 = scalar_lea.vmem [#allocation13], %s1362
          %1364 = dma.done %s1360, 256
        $region100: #{tpu_custom_call.1} parent=95 // pred_fallthru
          _
      $region96: #{tpu_custom_call.1} parent=5 // pred_fallthru
        _
    $region6: #{tpu_custom_call.1} parent=1 // loop_footer
      %s30 = sadd.s32 1, %s26
    $region7: #{tpu_custom_call.1} parent=1 // loop_footer_branch
      %25 = sbr.rel target = $region3
    $region8: #{tpu_custom_call.1} parent=1 // loop_exit
      _
    %1365 = vsyncpa [#allocation3], 1
    %s1366 = scalar_lea.sflag [#allocation3], 1
    %1367 = vsyncpa %s1366, 1
    %1368 = vsyncpa [#allocation6], 1
    %1369 = vsyncpa [#allocation9], 1
    %1370 = vsyncpa [#allocation12], 1
    %1371 = vsyncpa [#allocation4], 1
    %s1372 = scalar_lea.sflag [#allocation4], 1
    %1373 = vsyncpa %s1372, 1

</llo_original>
